<compile_context>
chip_gen: v7x
topology: tpu7x:2x2x1
jax: 0.10.0
libtpu: 0.0.40
codegen_flags: <defaults>
</compile_context>

<pallas_src>
import functools
import math

import jax
import jax.numpy as jnp
from jax.experimental import pallas as pl
from jax.experimental.pallas import tpu as pltpu

_INV_SQRT2 = 1.0 / math.sqrt(2.0)
_SQRT_2_OVER_PI = math.sqrt(2.0 / math.pi)


# ------------------------------- kernel -------------------------------------


def _ffn_kernel(x_ref, w1_ref, b1_ref, w2_ref, b2_ref, o_ref, *, approximate):
    """Fused Linear -> GELU -> Linear on a (TM, D) row tile."""
    x = x_ref[...]                                            # (TM, D) bf16

    # Linear 1: bf16 operands on the MXU, f32 accumulation; bias add in f32.
    h = jnp.dot(x, w1_ref[...], preferred_element_type=jnp.float32)  # (TM, F)
    h = h + b1_ref[...]

    if approximate:
        # tanh-form GELU: transcendental goes to the EUP slot (opt-in).
        h = 0.5 * h * (1.0 + jnp.tanh(_SQRT_2_OVER_PI *
                                      (h + 0.044715 * h * h * h)))
    else:
        # Exact GELU (PyTorch nn.GELU default).
        h = 0.5 * h * (1.0 + jax.lax.erf(h * _INV_SQRT2))

    # Dropout(p=0.0) is the identity at inference -> nothing to do.

    # Linear 2: bf16 operands, f32 accumulation.
    y = jnp.dot(h.astype(jnp.bfloat16), w2_ref[...],
                preferred_element_type=jnp.float32)           # (TM, D)
    o_ref[...] = (y + b2_ref[...]).astype(o_ref.dtype)


# ------------------------------- wrapper ------------------------------------


def _round_up(x, m):
    return ((x + m - 1) // m) * m


def _vmem_ceiling_bytes():
    """Per-core VMEM capacity with ~20% headroom for Mosaic internal scratch."""
    cap = 64 * 1024 * 1024                       # conservative default (v7x per-TC)
    try:
        info = pltpu.get_tpu_info()
        cap = int(getattr(info, "vmem_capacity_bytes", cap))
    except Exception:
        pass
    return max(16 * 1024 * 1024, int(0.8 * cap))


def feed_forward(x, w1, b1, w2, b2, *, block_rows=256, approximate_gelu=False):
    """y = GELU(x @ w1 + b1) @ w2 + b2, fused in one Pallas kernel.

    x : (..., D)
    w1: (D, F)   b1: (1, F)
    w2: (F, D)   b2: (1, D)
    """
    orig_shape = x.shape
    D = x.shape[-1]
    F = w1.shape[1]
    assert w1.shape[0] == D and w2.shape == (F, D)

    # bf16 input stream: halves x DMA + double-buffer footprint; accumulation
    # inside the kernel stays f32.
    xm = x.reshape(-1, D).astype(jnp.bfloat16)
    M = xm.shape[0]

    vmem_ceiling = _vmem_ceiling_bytes()

    # bf16 weights for the MXU (f32 biases added after f32 accumulation).
    w1_c = w1.astype(jnp.bfloat16)
    w2_c = w2.astype(jnp.bfloat16)
    b1_c = b1.reshape(1, F).astype(jnp.float32)
    b2_c = b2.reshape(1, D).astype(jnp.float32)

    bytes_w = (w1_c.size + w2_c.size) * 2 + (b1_c.size + b2_c.size) * 4
    # TODO(synk): when resident bf16 weights exceed ~1/3 of VMEM (large D/F),
    # switch to an F-tiled grid axis with a (TM, D) f32 accumulator instead of
    # whole-array VMEM residents.
    assert 3 * bytes_w <= vmem_ceiling, (
        f"weights ({bytes_w} B) too large for the resident-VMEM path")

    # Row tile: multiple of 8 sublanes, big enough to amortize per-step
    # overhead and fill the MXU's M dimension, but clamped so the grid stays
    # >= 2 whenever M allows (both v7x TensorCores get work).
    TM = min(block_rows, max(8, _round_up(pl.cdiv(M, 2), 8)))
    TM = _round_up(TM, 8)

    def vmem_budget(tm):
        bytes_io = 2 * tm * D * 2 + 2 * tm * D * 4          # x bf16 + out f32, 2-deep
        bytes_h = tm * F * (4 + 4 + 2) + tm * D * 4         # h f32 + GELU temp + bf16 cast + y
        return bytes_w + bytes_io + bytes_h

    # Shrink the tile if the estimate (with headroom) would not fit.
    while TM > 8 and int(1.5 * vmem_budget(TM)) + (4 << 20) > vmem_ceiling:
        TM = max(8, _round_up(TM // 2, 8))

    grid = (pl.cdiv(M, TM),)     # no wrapper-side pad: tail block is masked

    vmem_bytes = min(vmem_ceiling,
                     max(32 * 1024 * 1024,
                         int(1.5 * vmem_budget(TM)) + (4 << 20)))

    # Whole-array, non-pipelined VMEM residents for the constant operands
    # (constant index maps would only waste VMEM on double-buffering).
    resident = pl.BlockSpec(memory_space=pltpu.MemorySpace.VMEM)

    cost = pl.CostEstimate(
        flops=4 * M * D * F,                        # two matmuls
        transcendentals=M * F,                      # one erf/tanh per h element
        bytes_accessed=xm.size * 2 + bytes_w + M * D * 4)

    kernel = functools.partial(_ffn_kernel, approximate=approximate_gelu)

    out = pl.pallas_call(
        kernel,
        out_shape=jax.ShapeDtypeStruct((M, D), jnp.float32),
        grid=grid,
        in_specs=[
            pl.BlockSpec((TM, D), lambda i: (i, 0)),   # row tile of x
            resident, resident, resident, resident,    # w1, b1, w2, b2
        ],
        out_specs=pl.BlockSpec((TM, D), lambda i: (i, 0)),
        compiler_params=pltpu.CompilerParams(
            dimension_semantics=("parallel",),
            vmem_limit_bytes=vmem_bytes,
        ),
        cost_estimate=cost,
    )(xm, w1_c, b1_c, w2_c, b2_c)

    return out.reshape(orig_shape)


# ------------------------------ reference -----------------------------------


def _reference(x, w1, b1, w2, b2):
    """Pure-JAX reference with the same bf16-operand / f32-accumulate recipe."""
    D = x.shape[-1]
    xm = x.reshape(-1, D).astype(jnp.bfloat16)
    h = jnp.dot(xm, w1.astype(jnp.bfloat16),
                preferred_element_type=jnp.float32) + b1.reshape(1, -1)
    h = 0.5 * h * (1.0 + jax.lax.erf(h * _INV_SQRT2))
    y = jnp.dot(h.astype(jnp.bfloat16), w2.astype(jnp.bfloat16),
                preferred_element_type=jnp.float32) + b2.reshape(1, -1)
    return y.reshape(x.shape)


# -------------------------------- main --------------------------------------


if __name__ == "__main__":
    # FeedForward(dim=128, mult=4); input (batch=2, seq=128, dim=128).
    # D and F are multiples of 128 so every load/store is lane-dense.
    DIM = 128
    MULT = 4
    INNER = int(DIM * MULT)
    B, N = 2, 128

    key = jax.random.PRNGKey(0)
    k1, k2, k3, k4, kx = jax.random.split(key, 5)

    # nn.Linear-style init: U(-1/sqrt(fan_in), 1/sqrt(fan_in)).
    bound1 = 1.0 / math.sqrt(DIM)
    bound2 = 1.0 / math.sqrt(INNER)
    w1 = jax.random.uniform(k1, (DIM, INNER), jnp.float32, -bound1, bound1)
    b1 = jax.random.uniform(k2, (1, INNER), jnp.float32, -bound1, bound1)
    w2 = jax.random.uniform(k3, (INNER, DIM), jnp.float32, -bound2, bound2)
    b2 = jax.random.uniform(k4, (1, DIM), jnp.float32, -bound2, bound2)
    x = jax.random.normal(kx, (B, N, DIM), jnp.float32)

    out = feed_forward(x, w1, b1, w2, b2, block_rows=256)
    out = jax.block_until_ready(out)

    ref = _reference(x, w1, b1, w2, b2)
    assert out.shape == (B, N, DIM)
    assert bool(jnp.all(jnp.isfinite(out)))
    max_err = float(jnp.max(jnp.abs(out - ref)))
    assert max_err < 1e-2, f"max abs error vs reference: {max_err}"
    print("KERNEL_OK")
</pallas_src>

<mosaic_0001>
module attributes {stable_mosaic.version = 11 : i64} {
  func.func @_ffn_kernel(%arg0: i32, %arg1: memref<128x128xbf16, #tpu.memory_space<vmem>>, %arg2: memref<128x512xbf16, #tpu.memory_space<vmem>>, %arg3: memref<1x512xf32, #tpu.memory_space<vmem>>, %arg4: memref<512x128xbf16, #tpu.memory_space<vmem>>, %arg5: memref<1x128xf32, #tpu.memory_space<vmem>>, %arg6: memref<128x128xf32, #tpu.memory_space<vmem>>) attributes {dimension_semantics = [#tpu.dimension_semantics<parallel>], iteration_bounds = array<i64: 2>, scalar_prefetch = 0 : i64, scratch_operands = 0 : i64, tpu.core_type = #tpu.core_type<tc>, window_params = [{transform_indices = @transform_0, window_bounds = array<i64: 128, 128>}, {pipeline_mode = #tpu.pipeline_mode<synchronous>, transform_indices = @transform_1, window_bounds = array<i64: 128, 512>}, {pipeline_mode = #tpu.pipeline_mode<synchronous>, transform_indices = @transform_2, window_bounds = array<i64: 1, 512>}, {pipeline_mode = #tpu.pipeline_mode<synchronous>, transform_indices = @transform_3, window_bounds = array<i64: 512, 128>}, {pipeline_mode = #tpu.pipeline_mode<synchronous>, transform_indices = @transform_4, window_bounds = array<i64: 1, 128>}, {transform_indices = @transform_5, window_bounds = array<i64: 128, 128>}]} {
    %c0 = arith.constant 0 : index
    %c0_0 = arith.constant 0 : index
    %0 = vector.load %arg1[%c0, %c0_0] : memref<128x128xbf16, #tpu.memory_space<vmem>>, vector<128x128xbf16>
    %c0_1 = arith.constant 0 : index
    %c0_2 = arith.constant 0 : index
    %1 = vector.load %arg2[%c0_1, %c0_2] : memref<128x512xbf16, #tpu.memory_space<vmem>>, vector<128x512xbf16>
    %cst = arith.constant dense<0.000000e+00> : vector<128x512xf32>
    %2 = tpu.matmul %0, %1, %cst {dimension_numbers = #tpu.dot_dimension_numbers<[1], [0], [0], [1], [0, 0, 1, 1], [], []>} : vector<128x128xbf16>, vector<128x512xbf16>, vector<128x512xf32> -> vector<128x512xf32>
    %c0_3 = arith.constant 0 : index
    %c0_4 = arith.constant 0 : index
    %3 = vector.load %arg3[%c0_3, %c0_4] : memref<1x512xf32, #tpu.memory_space<vmem>>, vector<1x512xf32>
    %4 = vector.broadcast %3 : vector<1x512xf32> to vector<128x512xf32>
    %5 = arith.addf %2, %4 : vector<128x512xf32>
    %cst_5 = arith.constant 5.000000e-01 : f32
    %6 = vector.broadcast %cst_5 : f32 to vector<128x512xf32>
    %7 = arith.mulf %6, %5 : vector<128x512xf32>
    %cst_6 = arith.constant 0.707106769 : f32
    %8 = vector.broadcast %cst_6 : f32 to vector<128x512xf32>
    %9 = arith.mulf %5, %8 : vector<128x512xf32>
    %10 = math.erf %9 : vector<128x512xf32>
    %cst_7 = arith.constant 1.000000e+00 : f32
    %11 = vector.broadcast %cst_7 : f32 to vector<128x512xf32>
    %12 = arith.addf %11, %10 : vector<128x512xf32>
    %13 = arith.mulf %7, %12 : vector<128x512xf32>
    %14 = arith.truncf %13 : vector<128x512xf32> to vector<128x512xbf16>
    %c0_8 = arith.constant 0 : index
    %c0_9 = arith.constant 0 : index
    %15 = vector.load %arg4[%c0_8, %c0_9] : memref<512x128xbf16, #tpu.memory_space<vmem>>, vector<512x128xbf16>
    %cst_10 = arith.constant dense<0.000000e+00> : vector<128x128xf32>
    %16 = tpu.matmul %14, %15, %cst_10 {dimension_numbers = #tpu.dot_dimension_numbers<[1], [0], [0], [1], [0, 0, 1, 1], [], []>} : vector<128x512xbf16>, vector<512x128xbf16>, vector<128x128xf32> -> vector<128x128xf32>
    %c0_11 = arith.constant 0 : index
    %c0_12 = arith.constant 0 : index
    %17 = vector.load %arg5[%c0_11, %c0_12] : memref<1x128xf32, #tpu.memory_space<vmem>>, vector<1x128xf32>
    %18 = vector.broadcast %17 : vector<1x128xf32> to vector<128x128xf32>
    %19 = arith.addf %16, %18 : vector<128x128xf32>
    %c0_13 = arith.constant 0 : index
    %c0_14 = arith.constant 0 : index
    %20 = vector.load %arg6[%c0_13, %c0_14] : memref<128x128xf32, #tpu.memory_space<vmem>>, vector<128x128xf32>
    tpu.vector_store %arg6[%c0_13, %c0_14], %19 {strides = array<i32>} : memref<128x128xf32, #tpu.memory_space<vmem>>, vector<128x128xf32>,
    return
  }
  func.func @transform_0(%arg0: i32) -> (i32, i32) {
    %c0_i32 = arith.constant 0 : i32
    %c0_i32_0 = arith.constant 0 : i32
    return %arg0, %c0_i32 : i32, i32
  }
  func.func @transform_1(%arg0: i32) -> (i32, i32) {
    %c0_i32 = arith.constant 0 : i32
    %c0_i32_0 = arith.constant 0 : i32
    %c0_i32_1 = arith.constant 0 : i32
    return %c0_i32, %c0_i32_0 : i32, i32
  }
  func.func @transform_2(%arg0: i32) -> (i32, i32) {
    %c0_i32 = arith.constant 0 : i32
    %c0_i32_0 = arith.constant 0 : i32
    %c0_i32_1 = arith.constant 0 : i32
    return %c0_i32, %c0_i32_0 : i32, i32
  }
  func.func @transform_3(%arg0: i32) -> (i32, i32) {
    %c0_i32 = arith.constant 0 : i32
    %c0_i32_0 = arith.constant 0 : i32
    %c0_i32_1 = arith.constant 0 : i32
    return %c0_i32, %c0_i32_0 : i32, i32
  }
  func.func @transform_4(%arg0: i32) -> (i32, i32) {
    %c0_i32 = arith.constant 0 : i32
    %c0_i32_0 = arith.constant 0 : i32
    %c0_i32_1 = arith.constant 0 : i32
    return %c0_i32, %c0_i32_0 : i32, i32
  }
  func.func @transform_5(%arg0: i32) -> (i32, i32) {
    %c0_i32 = arith.constant 0 : i32
    %c0_i32_0 = arith.constant 0 : i32
    return %arg0, %c0_i32 : i32, i32
  }
}

</mosaic_0001>

<llo_original>
// kernel: tpu_custom_call.1
$region0: #{tpu_custom_call.1}
  #allocation0 [shape = 'u32[]', space=smem, size = 0x4, offset = 0x4, fixed_abs, tag = 'smem constant byte address 0x4 - core index']
  #allocation1 [shape = 'u32[144,128]{1,0:T(1,128)}', space=vmem, size = 0x12000, scoped, tag = 'internal scratch']
  %s0 = inlined_call_operand.hbm [shape: bf16[256,128], index: 0, kind: input, shape index: {}]
  %s1 = inlined_call_operand.hbm [shape: bf16[128,512], index: 1, kind: input, shape index: {}]
  %s2 = inlined_call_operand.vmem [shape: f32[1,512], index: 2, kind: input, shape index: {}]
  %s3 = inlined_call_operand.hbm [shape: bf16[512,128], index: 3, kind: input, shape index: {}]
  %s4 = inlined_call_operand.vmem [shape: f32[1,128], index: 4, kind: input, shape index: {}]
  %s5 = inlined_call_operand.hbm [shape: f32[256,128], index: 5, kind: output, shape index: {}]
  %s6 = sld [smem:[#allocation0]]
  $region65: #{tpu_custom_call.1} parent=0
    _
  %s8 = ssub.s32 1, %s6
  %s9 = scalar_select 0, %s8, %s6
  $region1: #{tpu_custom_call.1} parent=0
    #allocation2 [shape = 'u8[65536]{0}', space=vmem, size = 0x10000, scoped, tag = 'input window, operand 0']
    #allocation3 [shape = 's32[2]{0}', space=sflag, size = 0x8, scoped, tag = 'scoped memory for tpu_custom_call.1']
    #allocation4 [shape = 's32[2]{0}', space=sflag, size = 0x8, scoped, tag = 'scoped memory for tpu_custom_call.1']
    #allocation5 [shape = 'u8[131072]{0}', space=vmem, size = 0x20000, scoped, tag = 'input window, operand 1, single buffered']
    #allocation6 [shape = 's32[1]{0}', space=sflag, size = 0x4, scoped, tag = 'scoped memory for tpu_custom_call.1']
    #allocation7 [shape = 'u8[131072]{0}', space=vmem, size = 0x20000, scoped, tag = 'input window, operand 3, single buffered']
    #allocation8 [shape = 'u8[131072]{0}', space=vmem, size = 0x20000, scoped, tag = 'output window, operand 0']
    %10 = vsyncpa [#allocation3], 0
    %s11 = scalar_lea.sflag [#allocation3], 1
    %12 = vsyncpa %s11, 0
    %13 = vsyncpa [#allocation6], 0
    %14 = vsyncpa [#allocation4], 0
    %s15 = scalar_lea.sflag [#allocation4], 1
    %16 = vsyncpa %s15, 0
    loop: start=0, step=1, limit=4
    $region2: #{tpu_custom_call.1} parent=1 // loop_pre_header
      _
    $region3: #{tpu_custom_call.1} parent=1 // loop_header
      %s18 = sphi 0, %s22
      %p19 = scmp.ge.s32.totalorder %s18, 4
      %s28 = sphi 0, %s30
      %s31 = sphi 0, %s28
      %s32 = sphi 0, %s31
      %s48 = sphi 0, %s32
      %s52 = sphi 0, %s52
      %s54 = sphi 0, %s52
      %s55 = sphi 0, %s54
      %s69 = sphi 0, %s55
      %s73 = sphi 0, %s73
      %s75 = sphi 0, %s73
      %s76 = sphi 0, %s75
      %s90 = sphi 0, %s76
      %s94 = sphi 0, %s94
      %s96 = sphi 0, %s94
      %s97 = sphi 0, %s96
      %s111 = sphi 0, %s97
      %s115 = sphi 0, %s115
      %s117 = sphi 0, %s115
      %s118 = sphi 0, %s117
      %s132 = sphi 0, %s118
      %s138 = sphi 0, %s140
      %s141 = sphi 0, %s138
      %s142 = sphi 0, %s141
      %s158 = sphi 0, %s142
    $region4: #{tpu_custom_call.1} parent=1 // loop_header_branch
      %21 = sbr.rel (%p19) target = $region8
    $region5: #{tpu_custom_call.1} parent=1 // loop_body
      %s23 = ssub.s32 %s18, 1
      %s24 = ssub.s32 %s18, 2
      %s25 = sadd.s32 %s18, 1
      %s26 = ssub.s32 %s18, %s25
      %p27 = scmp.eq.s32.totalorder %s26, 0
      %s29 = sadd.s32 %s28, 1
      %s30 = scalar_select %p27, %s28, %s29
      %p33 = pneg %p27
      %p34 = scmp.eq.s32.totalorder %s18, 1
      %p35 = por %p33, %p34
      %p36 = scmp.ne.s32.totalorder %s28, %s31
      %p37 = scmp.eq.s32.totalorder %s18, 0
      %p38 = por %p36, %p37
      %p39 = scmp.ne.s32.totalorder %s28, %s31
      %p40 = scmp.eq.s32.totalorder %s23, 1
      %p41 = por %p39, %p40
      %p42 = scmp.ne.s32.totalorder %s31, %s32
      %p43 = scmp.eq.s32.totalorder %s23, 0
      %p44 = por %p42, %p43
      %p45 = scmp.ne.s32.totalorder %s31, %s32
      %p46 = scmp.eq.s32.totalorder %s24, 1
      %p47 = por %p45, %p46
      %p49 = scmp.ne.s32.totalorder %s32, %s48
      %p50 = scmp.eq.s32.totalorder %s24, 0
      %p51 = por %p49, %p50
      %s53 = sadd.s32 %s52, 1
      %p56 = scmp.eq.s32.totalorder %s18, 1
      %p57 = scmp.ne.s32.totalorder %s52, %s54
      %p58 = scmp.eq.s32.totalorder %s18, 0
      %p59 = por %p57, %p58
      %p60 = scmp.ne.s32.totalorder %s52, %s54
      %p61 = scmp.eq.s32.totalorder %s23, 1
      %p62 = por %p60, %p61
      %p63 = scmp.ne.s32.totalorder %s54, %s55
      %p64 = scmp.eq.s32.totalorder %s23, 0
      %p65 = por %p63, %p64
      %p66 = scmp.ne.s32.totalorder %s54, %s55
      %p67 = scmp.eq.s32.totalorder %s24, 1
      %p68 = por %p66, %p67
      %p70 = scmp.ne.s32.totalorder %s55, %s69
      %p71 = scmp.eq.s32.totalorder %s24, 0
      %p72 = por %p70, %p71
      %s74 = sadd.s32 %s73, 1
      %p77 = scmp.eq.s32.totalorder %s18, 1
      %p78 = scmp.ne.s32.totalorder %s73, %s75
      %p79 = scmp.eq.s32.totalorder %s18, 0
      %p80 = por %p78, %p79
      %p81 = scmp.ne.s32.totalorder %s73, %s75
      %p82 = scmp.eq.s32.totalorder %s23, 1
      %p83 = por %p81, %p82
      %p84 = scmp.ne.s32.totalorder %s75, %s76
      %p85 = scmp.eq.s32.totalorder %s23, 0
      %p86 = por %p84, %p85
      %p87 = scmp.ne.s32.totalorder %s75, %s76
      %p88 = scmp.eq.s32.totalorder %s24, 1
      %p89 = por %p87, %p88
      %p91 = scmp.ne.s32.totalorder %s76, %s90
      %p92 = scmp.eq.s32.totalorder %s24, 0
      %p93 = por %p91, %p92
      %s95 = sadd.s32 %s94, 1
      %p98 = scmp.eq.s32.totalorder %s18, 1
      %p99 = scmp.ne.s32.totalorder %s94, %s96
      %p100 = scmp.eq.s32.totalorder %s18, 0
      %p101 = por %p99, %p100
      %p102 = scmp.ne.s32.totalorder %s94, %s96
      %p103 = scmp.eq.s32.totalorder %s23, 1
      %p104 = por %p102, %p103
      %p105 = scmp.ne.s32.totalorder %s96, %s97
      %p106 = scmp.eq.s32.totalorder %s23, 0
      %p107 = por %p105, %p106
      %p108 = scmp.ne.s32.totalorder %s96, %s97
      %p109 = scmp.eq.s32.totalorder %s24, 1
      %p110 = por %p108, %p109
      %p112 = scmp.ne.s32.totalorder %s97, %s111
      %p113 = scmp.eq.s32.totalorder %s24, 0
      %p114 = por %p112, %p113
      %s116 = sadd.s32 %s115, 1
      %p119 = scmp.eq.s32.totalorder %s18, 1
      %p120 = scmp.ne.s32.totalorder %s115, %s117
      %p121 = scmp.eq.s32.totalorder %s18, 0
      %p122 = por %p120, %p121
      %p123 = scmp.ne.s32.totalorder %s115, %s117
      %p124 = scmp.eq.s32.totalorder %s23, 1
      %p125 = por %p123, %p124
      %p126 = scmp.ne.s32.totalorder %s117, %s118
      %p127 = scmp.eq.s32.totalorder %s23, 0
      %p128 = por %p126, %p127
      %p129 = scmp.ne.s32.totalorder %s117, %s118
      %p130 = scmp.eq.s32.totalorder %s24, 1
      %p131 = por %p129, %p130
      %p133 = scmp.ne.s32.totalorder %s118, %s132
      %p134 = scmp.eq.s32.totalorder %s24, 0
      %p135 = por %p133, %p134
      %s136 = ssub.s32 %s18, %s25
      %p137 = scmp.eq.s32.totalorder %s136, 0
      %s139 = sadd.s32 %s138, 1
      %s140 = scalar_select %p137, %s138, %s139
      %p143 = pneg %p137
      %p144 = scmp.eq.s32.totalorder %s18, 1
      %p145 = por %p143, %p144
      %p146 = scmp.ne.s32.totalorder %s138, %s141
      %p147 = scmp.eq.s32.totalorder %s18, 0
      %p148 = por %p146, %p147
      %p149 = scmp.ne.s32.totalorder %s138, %s141
      %p150 = scmp.eq.s32.totalorder %s23, 1
      %p151 = por %p149, %p150
      %p152 = scmp.ne.s32.totalorder %s141, %s142
      %p153 = scmp.eq.s32.totalorder %s23, 0
      %p154 = por %p152, %p153
      %p155 = scmp.ne.s32.totalorder %s141, %s142
      %p156 = scmp.eq.s32.totalorder %s24, 1
      %p157 = por %p155, %p156
      %p159 = scmp.ne.s32.totalorder %s142, %s158
      %p160 = scmp.eq.s32.totalorder %s24, 0
      %p161 = por %p159, %p160
      %p162 = scmp.le.s32.totalorder 1, %s18
      %p163 = scmp.lt.s32.totalorder %s18, 3
      %p164 = pnand %p162, %p163
      %p165 = pneg %p164
      // Predicated region
      $region9: #{tpu_custom_call.1} parent=5 // pred_check
        _
      $region10: #{tpu_custom_call.1} parent=5 // pred_check_branch
        %167 = sbr.rel (%p164) target = $region12
      $region11: #{tpu_custom_call.1} parent=5 // pred_region
        %s168 = ssub.s32 %s18, 1
        // Predicated region
        $region13: #{tpu_custom_call.1} parent=11 // pred_check
          %p169 = pneg %p65
        $region14: #{tpu_custom_call.1} parent=11 // pred_check_branch
          %171 = sbr.rel (%p169) target = $region16
        $region15: #{tpu_custom_call.1} parent=11 // pred_region
          %s173 = ssub.s32 4096, 4096
          %174 = vsyncadd [#allocation6], %s173
          %s175 = sshll.u32 [#allocation5], 4
          %s176 = int_to_ptr.vmem [resolvable:$true] %s175
          %181 = dma.hbm_to_vmem [thread:$0]  %s1, 4096, %s176, [#allocation6], 256, 256, 16
        $region16: #{tpu_custom_call.1} parent=11 // pred_fallthru
          _
        // Predicated region
        $region17: #{tpu_custom_call.1} parent=11 // pred_check
          %p182 = pneg %p86
        $region18: #{tpu_custom_call.1} parent=11 // pred_check_branch
          %184 = sbr.rel (%p182) target = $region20
        $region19: #{tpu_custom_call.1} parent=11 // pred_region
          _
        $region20: #{tpu_custom_call.1} parent=11 // pred_fallthru
          _
        // Predicated region
        $region21: #{tpu_custom_call.1} parent=11 // pred_check
          %p185 = pneg %p107
        $region22: #{tpu_custom_call.1} parent=11 // pred_check_branch
          %187 = sbr.rel (%p185) target = $region24
        $region23: #{tpu_custom_call.1} parent=11 // pred_region
          %s189 = ssub.s32 4096, 4096
          %190 = vsyncadd [#allocation6], %s189
          %s191 = sshll.u32 [#allocation7], 4
          %s192 = int_to_ptr.vmem [resolvable:$true] %s191
          %197 = dma.hbm_to_vmem [thread:$0]  %s3, 4096, %s192, [#allocation6], 64, 64, 4
        $region24: #{tpu_custom_call.1} parent=11 // pred_fallthru
          _
        // Predicated region
        $region25: #{tpu_custom_call.1} parent=11 // pred_check
          %p198 = pneg %p128
        $region26: #{tpu_custom_call.1} parent=11 // pred_check_branch
          %200 = sbr.rel (%p198) target = $region28
        $region27: #{tpu_custom_call.1} parent=11 // pred_region
          _
        $region28: #{tpu_custom_call.1} parent=11 // pred_fallthru
          _
      $region12: #{tpu_custom_call.1} parent=5 // pred_fallthru
        _
      %p201 = scmp.lt.s32.totalorder %s18, 2
      // Predicated region
      $region29: #{tpu_custom_call.1} parent=5 // pred_check
        %p202 = pneg %p201
      $region30: #{tpu_custom_call.1} parent=5 // pred_check_branch
        %204 = sbr.rel (%p202) target = $region32
      $region31: #{tpu_custom_call.1} parent=5 // pred_region
        // Predicated region
        $region33: #{tpu_custom_call.1} parent=31 // pred_check
          %p205 = pneg %p38
        $region34: #{tpu_custom_call.1} parent=31 // pred_check_branch
          %207 = sbr.rel (%p205) target = $region36
        $region35: #{tpu_custom_call.1} parent=31 // pred_region
          %s208 = sand.u32 %s28, 1
          %s209 = scalar_lea.sflag [#allocation3], %s208
          %s210 = sand.u32 %s28, 1
          %s211 = smul.addr %s210, 64
          %s212 = scalar_lea.vmem [#allocation2], %s211
          %s213 = smul.u32 16, %s18
          %s215 = ssub.s32 1024, 1024
          %216 = vsyncadd %s209, %s215
          %s217 = smul.addr %s213, 64
          %s218 = scalar_lea.hbm %s0, %s217
          %s219 = sshll.u32 %s212, 4
          %s220 = int_to_ptr.vmem [resolvable:$true] %s219
          %225 = dma.hbm_to_vmem [thread:$0]  %s218, 1024, %s220, %s209, 64, 64, 4
        $region36: #{tpu_custom_call.1} parent=31 // pred_fallthru
          _
      $region32: #{tpu_custom_call.1} parent=5 // pred_fallthru
        _
      %p226 = scmp.le.s32.totalorder 1, %s18
      %p227 = scmp.lt.s32.totalorder %s18, 3
      %p228 = pnand %p226, %p227
      %p229 = pneg %p228
      // Predicated region
      $region37: #{tpu_custom_call.1} parent=5 // pred_check
        _
      $region38: #{tpu_custom_call.1} parent=5 // pred_check_branch
        %231 = sbr.rel (%p228) target = $region40
      $region39: #{tpu_custom_call.1} parent=5 // pred_region
        %s232 = ssub.s32 %s18, 1
        %s233 = sand.u32 %s31, 1
        %s234 = scalar_lea.sflag [#allocation3], %s233
        %s235 = sand.u32 %s31, 1
        %s236 = smul.addr %s235, 64
        %s237 = scalar_lea.vmem [#allocation2], %s236
        // Predicated region
        $region41: #{tpu_custom_call.1} parent=39 // pred_check
          %p238 = pneg %p44
        $region42: #{tpu_custom_call.1} parent=39 // pred_check_branch
          %240 = sbr.rel (%p238) target = $region44
        $region43: #{tpu_custom_call.1} parent=39 // pred_region
          %241 = dma.done %s234, 1024
        $region44: #{tpu_custom_call.1} parent=39 // pred_fallthru
          _
        // Predicated region
        $region45: #{tpu_custom_call.1} parent=39 // pred_check
          %p242 = pneg %p65
        $region46: #{tpu_custom_call.1} parent=39 // pred_check_branch
          %244 = sbr.rel (%p242) target = $region48
        $region47: #{tpu_custom_call.1} parent=39 // pred_region
          %245 = dma.done [#allocation6], 4096
        $region48: #{tpu_custom_call.1} parent=39 // pred_fallthru
          _
        // Predicated region
        $region49: #{tpu_custom_call.1} parent=39 // pred_check
          %p246 = pneg %p107
        $region50: #{tpu_custom_call.1} parent=39 // pred_check_branch
          %248 = sbr.rel (%p246) target = $region52
        $region51: #{tpu_custom_call.1} parent=39 // pred_region
          %249 = dma.done [#allocation6], 4096
        $region52: #{tpu_custom_call.1} parent=39 // pred_fallthru
          _
        %s250 = sand.u32 %s31, 1
        %s251 = scalar_lea.sflag [#allocation3], %s250
        %s252 = sand.u32 %s31, 1
        %s253 = smul.addr %s252, 64
        %s254 = scalar_lea.vmem [#allocation2], %s253
        %p255 = pneg %p44
        %p256 = pneg %p41
        %p257 = pneg %p65
        %p258 = pneg %p62
        %p259 = pneg %p86
        %p260 = pneg %p83
        %p261 = pneg %p107
        %p262 = pneg %p104
        %p263 = pneg %p128
        %p264 = pneg %p125
        %p265 = pneg %p154
        %p266 = pneg %p151
        %s267 = sand.u32 %s141, 1
        %s268 = scalar_lea.sflag [#allocation4], %s267
        %s269 = sand.u32 %s141, 1
        %s270 = smul.addr %s269, 128
        %s271 = scalar_lea.vmem [#allocation8], %s270
        %s272 = smul.u32 16, %s23
        %s273 = smul.u32 16, %s23
        %v275 = vld [vmem:[%s237] sm:$0xf]
        %v276 = vld [vmem:[%s237 + $0x4] sm:$0xf]
        %v277 = vld [vmem:[%s237 + $0x8] sm:$0xf]
        %v278 = vld [vmem:[%s237 + $0xc] sm:$0xf]
        %v279 = vld [vmem:[%s237 + $0x10] sm:$0xf]
        %v280 = vld [vmem:[%s237 + $0x14] sm:$0xf]
        %v281 = vld [vmem:[%s237 + $0x18] sm:$0xf]
        %v282 = vld [vmem:[%s237 + $0x1c] sm:$0xf]
        %v283 = vld [vmem:[%s237 + $0x20] sm:$0xf]
        %v284 = vld [vmem:[%s237 + $0x24] sm:$0xf]
        %v285 = vld [vmem:[%s237 + $0x28] sm:$0xf]
        %v286 = vld [vmem:[%s237 + $0x2c] sm:$0xf]
        %v287 = vld [vmem:[%s237 + $0x30] sm:$0xf]
        %v288 = vld [vmem:[%s237 + $0x34] sm:$0xf]
        %v289 = vld [vmem:[%s237 + $0x38] sm:$0xf]
        %v290 = vld [vmem:[%s237 + $0x3c] sm:$0xf]
        %v291 = vld [vmem:[#allocation5] sm:$0xff]
        %v292 = vld [vmem:[#allocation5 + $0x8] sm:$0xff]
        %v293 = vld [vmem:[#allocation5 + $0x10] sm:$0xff]
        %v294 = vld [vmem:[#allocation5 + $0x18] sm:$0xff]
        %v295 = vld [vmem:[#allocation5 + $0x20] sm:$0xff]
        %v296 = vld [vmem:[#allocation5 + $0x28] sm:$0xff]
        %v297 = vld [vmem:[#allocation5 + $0x30] sm:$0xff]
        %v298 = vld [vmem:[#allocation5 + $0x38] sm:$0xff]
        %v299 = vld [vmem:[#allocation5 + $0x40] sm:$0xff]
        %v300 = vld [vmem:[#allocation5 + $0x48] sm:$0xff]
        %v301 = vld [vmem:[#allocation5 + $0x50] sm:$0xff]
        %v302 = vld [vmem:[#allocation5 + $0x58] sm:$0xff]
        %v303 = vld [vmem:[#allocation5 + $0x60] sm:$0xff]
        %v304 = vld [vmem:[#allocation5 + $0x68] sm:$0xff]
        %v305 = vld [vmem:[#allocation5 + $0x70] sm:$0xff]
        %v306 = vld [vmem:[#allocation5 + $0x78] sm:$0xff]
        %v307 = vld [vmem:[#allocation5 + $0x80] sm:$0xff]
        %v308 = vld [vmem:[#allocation5 + $0x88] sm:$0xff]
        %v309 = vld [vmem:[#allocation5 + $0x90] sm:$0xff]
        %v310 = vld [vmem:[#allocation5 + $0x98] sm:$0xff]
        %v311 = vld [vmem:[#allocation5 + $0xa0] sm:$0xff]
        %v312 = vld [vmem:[#allocation5 + $0xa8] sm:$0xff]
        %v313 = vld [vmem:[#allocation5 + $0xb0] sm:$0xff]
        %v314 = vld [vmem:[#allocation5 + $0xb8] sm:$0xff]
        %v315 = vld [vmem:[#allocation5 + $0xc0] sm:$0xff]
        %v316 = vld [vmem:[#allocation5 + $0xc8] sm:$0xff]
        %v317 = vld [vmem:[#allocation5 + $0xd0] sm:$0xff]
        %v318 = vld [vmem:[#allocation5 + $0xd8] sm:$0xff]
        %v319 = vld [vmem:[#allocation5 + $0xe0] sm:$0xff]
        %v320 = vld [vmem:[#allocation5 + $0xe8] sm:$0xff]
        %v321 = vld [vmem:[#allocation5 + $0xf0] sm:$0xff]
        %v322 = vld [vmem:[#allocation5 + $0xf8] sm:$0xff]
        %v323 = vld [vmem:[%s2] sm:$0xf]
        %v325 = vlaneseq
        %v326 = vshrl.u32 %v325, 7
        %v327 = vsub.s32 0, %v326
        %v328 = vrot.slane %v323, %v327
        %v329 = vlaneseq
        %v330 = vshrl.u32 %v329, 7
        %v331 = vsub.s32 1, %v330
        %v332 = vrot.slane %v323, %v331
        %v333 = vlaneseq
        %v334 = vshrl.u32 %v333, 7
        %v335 = vsub.s32 2, %v334
        %v336 = vrot.slane %v323, %v335
        %v337 = vlaneseq
        %v338 = vshrl.u32 %v337, 7
        %v339 = vsub.s32 3, %v338
        %v340 = vrot.slane %v323, %v339
        %v361 = vunpack.c.l.b16 %v275
        %v362 = vunpack.c.l.b16 %v276
        %v363 = vunpack.c.l.b16 %v277
        %v364 = vunpack.c.l.b16 %v278
        %v365 = vunpack.c.l.b16 %v279
        %v366 = vunpack.c.l.b16 %v280
        %v367 = vunpack.c.l.b16 %v281
        %v368 = vunpack.c.l.b16 %v282
        %v369 = vunpack.c.l.b16 %v283
        %v370 = vunpack.c.l.b16 %v284
        %v371 = vunpack.c.l.b16 %v285
        %v372 = vunpack.c.l.b16 %v286
        %v373 = vunpack.c.l.b16 %v287
        %v374 = vunpack.c.l.b16 %v288
        %v375 = vunpack.c.l.b16 %v289
        %v376 = vunpack.c.l.b16 %v290
        %v377 = vpack.c.b16 %v362, %v361
        %v378 = vpack.c.b16 %v364, %v363
        %v379 = vpack.c.b16 %v366, %v365
        %v380 = vpack.c.b16 %v368, %v367
        %v381 = vpack.c.b16 %v370, %v369
        %v382 = vpack.c.b16 %v372, %v371
        %v383 = vpack.c.b16 %v374, %v373
        %v384 = vpack.c.b16 %v376, %v375
        %v425 = vunpack.c.l.b16 %v291
        %v426 = vunpack.c.h.b16 %v291
        %v427 = vunpack.c.l.b16 %v292
        %v428 = vunpack.c.h.b16 %v292
        %v429 = vunpack.c.l.b16 %v293
        %v430 = vunpack.c.h.b16 %v293
        %v431 = vunpack.c.l.b16 %v294
        %v432 = vunpack.c.h.b16 %v294
        %v433 = vunpack.c.l.b16 %v295
        %v434 = vunpack.c.h.b16 %v295
        %v435 = vunpack.c.l.b16 %v296
        %v436 = vunpack.c.h.b16 %v296
        %v437 = vunpack.c.l.b16 %v297
        %v438 = vunpack.c.h.b16 %v297
        %v439 = vunpack.c.l.b16 %v298
        %v440 = vunpack.c.h.b16 %v298
        %v441 = vunpack.c.l.b16 %v299
        %v442 = vunpack.c.h.b16 %v299
        %v443 = vunpack.c.l.b16 %v300
        %v444 = vunpack.c.h.b16 %v300
        %v445 = vunpack.c.l.b16 %v301
        %v446 = vunpack.c.h.b16 %v301
        %v447 = vunpack.c.l.b16 %v302
        %v448 = vunpack.c.h.b16 %v302
        %v449 = vunpack.c.l.b16 %v303
        %v450 = vunpack.c.h.b16 %v303
        %v451 = vunpack.c.l.b16 %v304
        %v452 = vunpack.c.h.b16 %v304
        %v453 = vunpack.c.l.b16 %v305
        %v454 = vunpack.c.h.b16 %v305
        %v455 = vunpack.c.l.b16 %v306
        %v456 = vunpack.c.h.b16 %v306
        %v457 = vunpack.c.l.b16 %v307
        %v458 = vunpack.c.h.b16 %v307
        %v459 = vunpack.c.l.b16 %v308
        %v460 = vunpack.c.h.b16 %v308
        %v461 = vunpack.c.l.b16 %v309
        %v462 = vunpack.c.h.b16 %v309
        %v463 = vunpack.c.l.b16 %v310
        %v464 = vunpack.c.h.b16 %v310
        %v465 = vunpack.c.l.b16 %v311
        %v466 = vunpack.c.h.b16 %v311
        %v467 = vunpack.c.l.b16 %v312
        %v468 = vunpack.c.h.b16 %v312
        %v469 = vunpack.c.l.b16 %v313
        %v470 = vunpack.c.h.b16 %v313
        %v471 = vunpack.c.l.b16 %v314
        %v472 = vunpack.c.h.b16 %v314
        %v473 = vunpack.c.l.b16 %v315
        %v474 = vunpack.c.h.b16 %v315
        %v475 = vunpack.c.l.b16 %v316
        %v476 = vunpack.c.h.b16 %v316
        %v477 = vunpack.c.l.b16 %v317
        %v478 = vunpack.c.h.b16 %v317
        %v479 = vunpack.c.l.b16 %v318
        %v480 = vunpack.c.h.b16 %v318
        %v481 = vunpack.c.l.b16 %v319
        %v482 = vunpack.c.h.b16 %v319
        %v483 = vunpack.c.l.b16 %v320
        %v484 = vunpack.c.h.b16 %v320
        %v485 = vunpack.c.l.b16 %v321
        %v486 = vunpack.c.h.b16 %v321
        %v487 = vunpack.c.l.b16 %v322
        %v488 = vunpack.c.h.b16 %v322
        %v489 = vpack.c.b16 %v429, %v425
        %v490 = vpack.c.b16 %v430, %v426
        %v491 = vpack.c.b16 %v431, %v427
        %v492 = vpack.c.b16 %v432, %v428
        %v493 = vpack.c.b16 %v437, %v433
        %v494 = vpack.c.b16 %v438, %v434
        %v495 = vpack.c.b16 %v439, %v435
        %v496 = vpack.c.b16 %v440, %v436
        %v497 = vpack.c.b16 %v445, %v441
        %v498 = vpack.c.b16 %v446, %v442
        %v499 = vpack.c.b16 %v447, %v443
        %v500 = vpack.c.b16 %v448, %v444
        %v501 = vpack.c.b16 %v453, %v449
        %v502 = vpack.c.b16 %v454, %v450
        %v503 = vpack.c.b16 %v455, %v451
        %v504 = vpack.c.b16 %v456, %v452
        %v505 = vpack.c.b16 %v461, %v457
        %v506 = vpack.c.b16 %v462, %v458
        %v507 = vpack.c.b16 %v463, %v459
        %v508 = vpack.c.b16 %v464, %v460
        %v509 = vpack.c.b16 %v469, %v465
        %v510 = vpack.c.b16 %v470, %v466
        %v511 = vpack.c.b16 %v471, %v467
        %v512 = vpack.c.b16 %v472, %v468
        %v513 = vpack.c.b16 %v477, %v473
        %v514 = vpack.c.b16 %v478, %v474
        %v515 = vpack.c.b16 %v479, %v475
        %v516 = vpack.c.b16 %v480, %v476
        %v517 = vpack.c.b16 %v485, %v481
        %v518 = vpack.c.b16 %v486, %v482
        %v519 = vpack.c.b16 %v487, %v483
        %v520 = vpack.c.b16 %v488, %v484
        %553 = vmatprep.subr.bf16.mxu0 %v490
        %554 = vmatpush1.bf16.msra.mxu0 %v489
        %555 = vmatprep.subr.bf16.mxu0 %v494
        %556 = vmatpush1.bf16.msra.mxu0 %v493
        %557 = vmatprep.subr.bf16.mxu0 %v498
        %558 = vmatpush1.bf16.msra.mxu0 %v497
        %559 = vmatprep.subr.bf16.mxu0 %v502
        %560 = vmatpush1.bf16.msra.mxu0 %v501
        %561 = vmatprep.subr.bf16.mxu0 %v506
        %562 = vmatpush1.bf16.msra.mxu0 %v505
        %563 = vmatprep.subr.bf16.mxu0 %v510
        %564 = vmatpush1.bf16.msra.mxu0 %v509
        %565 = vmatprep.subr.bf16.mxu0 %v514
        %566 = vmatpush1.bf16.msra.mxu0 %v513
        %567 = vmatprep.subr.bf16.mxu0 %v518
        %568 = vmatpush1.bf16.msra.mxu0 %v517
        %569 = vmatprep.subr.bf16.mxu0 0
        %570 = vmatpush1.bf16.msra.mxu0 0
        %571 = vmatprep.subr.bf16.mxu0 0
        %572 = vmatpush1.bf16.msra.mxu0 0
        %573 = vmatprep.subr.bf16.mxu0 0
        %574 = vmatpush1.bf16.msra.mxu0 0
        %575 = vmatprep.subr.bf16.mxu0 0
        %576 = vmatpush1.bf16.msra.mxu0 0
        %577 = vmatprep.subr.bf16.mxu0 0
        %578 = vmatpush1.bf16.msra.mxu0 0
        %579 = vmatprep.subr.bf16.mxu0 0
        %580 = vmatpush1.bf16.msra.mxu0 0
        %581 = vmatprep.subr.bf16.mxu0 0
        %582 = vmatpush1.bf16.msra.mxu0 0
        %583 = vmatprep.subr.bf16.mxu0 0
        %584 = vmatpush1.bf16.msra.mxu0 0
        %585 = vmatprep.mubr.bf16.mxu0 0
        %586 = vmatmul.mubr.bf16.gmra.mrb[0].mxu0 %v377
        %v587 = vpop.f32.mrb[0].mxu0
        %v588 = vadd.f32 %v328, %v587
        %v589 = vpop.f32.mrb[0].mxu0
        %v590 = vadd.f32 %v332, %v589
        %v591 = vpop.f32.mrb[0].mxu0
        %v592 = vadd.f32 %v328, %v591
        %v593 = vpop.f32.mrb[0].mxu0
        %v594 = vadd.f32 %v332, %v593
        %595 = vmatprep.mubr.bf16.mxu0 0
        %596 = vmatmul.mubr.bf16.gmra.mrb[0].mxu0 %v378
        %v597 = vpop.f32.mrb[0].mxu0
        %v598 = vadd.f32 %v328, %v597
        %v599 = vpop.f32.mrb[0].mxu0
        %v600 = vadd.f32 %v332, %v599
        %v601 = vpop.f32.mrb[0].mxu0
        %v602 = vadd.f32 %v328, %v601
        %v603 = vpop.f32.mrb[0].mxu0
        %v604 = vadd.f32 %v332, %v603
        %605 = vmatprep.mubr.bf16.mxu0 0
        %606 = vmatmul.mubr.bf16.gmra.mrb[0].mxu0 %v379
        %v607 = vpop.f32.mrb[0].mxu0
        %v608 = vadd.f32 %v328, %v607
        %v609 = vpop.f32.mrb[0].mxu0
        %v610 = vadd.f32 %v332, %v609
        %v611 = vpop.f32.mrb[0].mxu0
        %v612 = vadd.f32 %v328, %v611
        %v613 = vpop.f32.mrb[0].mxu0
        %v614 = vadd.f32 %v332, %v613
        %615 = vmatprep.mubr.bf16.mxu0 0
        %616 = vmatmul.mubr.bf16.gmra.mrb[0].mxu0 %v380
        %v617 = vpop.f32.mrb[0].mxu0
        %v618 = vadd.f32 %v328, %v617
        %v619 = vpop.f32.mrb[0].mxu0
        %v620 = vadd.f32 %v332, %v619
        %v621 = vpop.f32.mrb[0].mxu0
        %v622 = vadd.f32 %v328, %v621
        %v623 = vpop.f32.mrb[0].mxu0
        %v624 = vadd.f32 %v332, %v623
        %625 = vmatprep.mubr.bf16.mxu0 0
        %626 = vmatmul.mubr.bf16.gmra.mrb[0].mxu0 %v381
        %v627 = vpop.f32.mrb[0].mxu0
        %v628 = vadd.f32 %v328, %v627
        %v629 = vpop.f32.mrb[0].mxu0
        %v630 = vadd.f32 %v332, %v629
        %v631 = vpop.f32.mrb[0].mxu0
        %v632 = vadd.f32 %v328, %v631
        %v633 = vpop.f32.mrb[0].mxu0
        %v634 = vadd.f32 %v332, %v633
        %635 = vmatprep.mubr.bf16.mxu0 0
        %636 = vmatmul.mubr.bf16.gmra.mrb[0].mxu0 %v382
        %v637 = vpop.f32.mrb[0].mxu0
        %v638 = vadd.f32 %v328, %v637
        %v639 = vpop.f32.mrb[0].mxu0
        %v640 = vadd.f32 %v332, %v639
        %v641 = vpop.f32.mrb[0].mxu0
        %v642 = vadd.f32 %v328, %v641
        %v643 = vpop.f32.mrb[0].mxu0
        %v644 = vadd.f32 %v332, %v643
        %645 = vmatprep.mubr.bf16.mxu0 0
        %646 = vmatmul.mubr.bf16.gmra.mrb[0].mxu0 %v383
        %v647 = vpop.f32.mrb[0].mxu0
        %v648 = vadd.f32 %v328, %v647
        %v649 = vpop.f32.mrb[0].mxu0
        %v650 = vadd.f32 %v332, %v649
        %v651 = vpop.f32.mrb[0].mxu0
        %v652 = vadd.f32 %v328, %v651
        %v653 = vpop.f32.mrb[0].mxu0
        %v654 = vadd.f32 %v332, %v653
        %655 = vmatprep.mubr.bf16.mxu0 0
        %656 = vmatmul.mubr.bf16.gmra.mrb[0].mxu0 %v384
        %v657 = vpop.f32.mrb[0].mxu0
        %v658 = vadd.f32 %v328, %v657
        %v659 = vpop.f32.mrb[0].mxu0
        %v660 = vadd.f32 %v332, %v659
        %v661 = vpop.f32.mrb[0].mxu0
        %v662 = vadd.f32 %v328, %v661
        %v663 = vpop.f32.mrb[0].mxu0
        %v664 = vadd.f32 %v332, %v663
        %665 = vdwg.mxu0
        %666 = vmatprep.subr.bf16.mxu0 %v492
        %667 = vmatpush1.bf16.msra.mxu0 %v491
        %668 = vmatprep.subr.bf16.mxu0 %v496
        %669 = vmatpush1.bf16.msra.mxu0 %v495
        %670 = vmatprep.subr.bf16.mxu0 %v500
        %671 = vmatpush1.bf16.msra.mxu0 %v499
        %672 = vmatprep.subr.bf16.mxu0 %v504
        %673 = vmatpush1.bf16.msra.mxu0 %v503
        %674 = vmatprep.subr.bf16.mxu0 %v508
        %675 = vmatpush1.bf16.msra.mxu0 %v507
        %676 = vmatprep.subr.bf16.mxu0 %v512
        %677 = vmatpush1.bf16.msra.mxu0 %v511
        %678 = vmatprep.subr.bf16.mxu0 %v516
        %679 = vmatpush1.bf16.msra.mxu0 %v515
        %680 = vmatprep.subr.bf16.mxu0 %v520
        %681 = vmatpush1.bf16.msra.mxu0 %v519
        %682 = vmatprep.subr.bf16.mxu0 0
        %683 = vmatpush1.bf16.msra.mxu0 0
        %684 = vmatprep.subr.bf16.mxu0 0
        %685 = vmatpush1.bf16.msra.mxu0 0
        %686 = vmatprep.subr.bf16.mxu0 0
        %687 = vmatpush1.bf16.msra.mxu0 0
        %688 = vmatprep.subr.bf16.mxu0 0
        %689 = vmatpush1.bf16.msra.mxu0 0
        %690 = vmatprep.subr.bf16.mxu0 0
        %691 = vmatpush1.bf16.msra.mxu0 0
        %692 = vmatprep.subr.bf16.mxu0 0
        %693 = vmatpush1.bf16.msra.mxu0 0
        %694 = vmatprep.subr.bf16.mxu0 0
        %695 = vmatpush1.bf16.msra.mxu0 0
        %696 = vmatprep.subr.bf16.mxu0 0
        %697 = vmatpush1.bf16.msra.mxu0 0
        %698 = vmatprep.mubr.bf16.mxu0 0
        %699 = vmatmul.mubr.bf16.gmra.mrb[0].mxu0 %v377
        %v700 = vpop.f32.mrb[0].mxu0
        %v701 = vadd.f32 %v336, %v700
        %v702 = vpop.f32.mrb[0].mxu0
        %v703 = vadd.f32 %v340, %v702
        %v704 = vpop.f32.mrb[0].mxu0
        %v705 = vadd.f32 %v336, %v704
        %v706 = vpop.f32.mrb[0].mxu0
        %v707 = vadd.f32 %v340, %v706
        %708 = vmatprep.mubr.bf16.mxu0 0
        %709 = vmatmul.mubr.bf16.gmra.mrb[0].mxu0 %v378
        %v710 = vpop.f32.mrb[0].mxu0
        %v711 = vadd.f32 %v336, %v710
        %v712 = vpop.f32.mrb[0].mxu0
        %v713 = vadd.f32 %v340, %v712
        %v714 = vpop.f32.mrb[0].mxu0
        %v715 = vadd.f32 %v336, %v714
        %v716 = vpop.f32.mrb[0].mxu0
        %v717 = vadd.f32 %v340, %v716
        %718 = vmatprep.mubr.bf16.mxu0 0
        %719 = vmatmul.mubr.bf16.gmra.mrb[0].mxu0 %v379
        %v720 = vpop.f32.mrb[0].mxu0
        %v721 = vadd.f32 %v336, %v720
        %v722 = vpop.f32.mrb[0].mxu0
        %v723 = vadd.f32 %v340, %v722
        %v724 = vpop.f32.mrb[0].mxu0
        %v725 = vadd.f32 %v336, %v724
        %v726 = vpop.f32.mrb[0].mxu0
        %v727 = vadd.f32 %v340, %v726
        %728 = vmatprep.mubr.bf16.mxu0 0
        %729 = vmatmul.mubr.bf16.gmra.mrb[0].mxu0 %v380
        %v730 = vpop.f32.mrb[0].mxu0
        %v731 = vadd.f32 %v336, %v730
        %v732 = vpop.f32.mrb[0].mxu0
        %v733 = vadd.f32 %v340, %v732
        %v734 = vpop.f32.mrb[0].mxu0
        %v735 = vadd.f32 %v336, %v734
        %v736 = vpop.f32.mrb[0].mxu0
        %v737 = vadd.f32 %v340, %v736
        %738 = vmatprep.mubr.bf16.mxu0 0
        %739 = vmatmul.mubr.bf16.gmra.mrb[0].mxu0 %v381
        %v740 = vpop.f32.mrb[0].mxu0
        %v741 = vadd.f32 %v336, %v740
        %v742 = vpop.f32.mrb[0].mxu0
        %v743 = vadd.f32 %v340, %v742
        %v744 = vpop.f32.mrb[0].mxu0
        %v745 = vadd.f32 %v336, %v744
        %v746 = vpop.f32.mrb[0].mxu0
        %v747 = vadd.f32 %v340, %v746
        %748 = vmatprep.mubr.bf16.mxu0 0
        %749 = vmatmul.mubr.bf16.gmra.mrb[0].mxu0 %v382
        %v750 = vpop.f32.mrb[0].mxu0
        %v751 = vadd.f32 %v336, %v750
        %v752 = vpop.f32.mrb[0].mxu0
        %v753 = vadd.f32 %v340, %v752
        %v754 = vpop.f32.mrb[0].mxu0
        %v755 = vadd.f32 %v336, %v754
        %v756 = vpop.f32.mrb[0].mxu0
        %v757 = vadd.f32 %v340, %v756
        %758 = vmatprep.mubr.bf16.mxu0 0
        %759 = vmatmul.mubr.bf16.gmra.mrb[0].mxu0 %v383
        %v760 = vpop.f32.mrb[0].mxu0
        %v761 = vadd.f32 %v336, %v760
        %v762 = vpop.f32.mrb[0].mxu0
        %v763 = vadd.f32 %v340, %v762
        %v764 = vpop.f32.mrb[0].mxu0
        %v765 = vadd.f32 %v336, %v764
        %v766 = vpop.f32.mrb[0].mxu0
        %v767 = vadd.f32 %v340, %v766
        %768 = vmatprep.mubr.bf16.mxu0 0
        %769 = vmatmul.mubr.bf16.gmra.mrb[0].mxu0 %v384
        %v770 = vpop.f32.mrb[0].mxu0
        %v771 = vadd.f32 %v336, %v770
        %v772 = vpop.f32.mrb[0].mxu0
        %v773 = vadd.f32 %v340, %v772
        %v774 = vpop.f32.mrb[0].mxu0
        %v775 = vadd.f32 %v336, %v774
        %v776 = vpop.f32.mrb[0].mxu0
        %v777 = vadd.f32 %v340, %v776
        %778 = vdwg.mxu0
        %v779 = vmul.f32 %v588, 0.5
        %v780 = vmul.f32 %v590, 0.5
        %v781 = vmul.f32 %v701, 0.5
        %v782 = vmul.f32 %v703, 0.5
        %v783 = vmul.f32 %v592, 0.5
        %v784 = vmul.f32 %v594, 0.5
        %v785 = vmul.f32 %v705, 0.5
        %v786 = vmul.f32 %v707, 0.5
        %v787 = vmul.f32 %v598, 0.5
        %v788 = vmul.f32 %v600, 0.5
        %v789 = vmul.f32 %v711, 0.5
        %v790 = vmul.f32 %v713, 0.5
        %v791 = vmul.f32 %v602, 0.5
        %v792 = vmul.f32 %v604, 0.5
        %v793 = vmul.f32 %v715, 0.5
        %v794 = vmul.f32 %v717, 0.5
        %v795 = vmul.f32 %v608, 0.5
        %v796 = vmul.f32 %v610, 0.5
        %v797 = vmul.f32 %v721, 0.5
        %v798 = vmul.f32 %v723, 0.5
        %v799 = vmul.f32 %v612, 0.5
        %v800 = vmul.f32 %v614, 0.5
        %v801 = vmul.f32 %v725, 0.5
        %v802 = vmul.f32 %v727, 0.5
        %v803 = vmul.f32 %v618, 0.5
        %v804 = vmul.f32 %v620, 0.5
        %v805 = vmul.f32 %v731, 0.5
        %v806 = vmul.f32 %v733, 0.5
        %v807 = vmul.f32 %v622, 0.5
        %v808 = vmul.f32 %v624, 0.5
        %v809 = vmul.f32 %v735, 0.5
        %v810 = vmul.f32 %v737, 0.5
        %v811 = vmul.f32 %v628, 0.5
        %v812 = vmul.f32 %v630, 0.5
        %v813 = vmul.f32 %v741, 0.5
        %v814 = vmul.f32 %v743, 0.5
        %v815 = vmul.f32 %v632, 0.5
        %v816 = vmul.f32 %v634, 0.5
        %v817 = vmul.f32 %v745, 0.5
        %v818 = vmul.f32 %v747, 0.5
        %v819 = vmul.f32 %v638, 0.5
        %v820 = vmul.f32 %v640, 0.5
        %v821 = vmul.f32 %v751, 0.5
        %v822 = vmul.f32 %v753, 0.5
        %v823 = vmul.f32 %v642, 0.5
        %v824 = vmul.f32 %v644, 0.5
        %v825 = vmul.f32 %v755, 0.5
        %v826 = vmul.f32 %v757, 0.5
        %v827 = vmul.f32 %v648, 0.5
        %v828 = vmul.f32 %v650, 0.5
        %v829 = vmul.f32 %v761, 0.5
        %v830 = vmul.f32 %v763, 0.5
        %v831 = vmul.f32 %v652, 0.5
        %v832 = vmul.f32 %v654, 0.5
        %v833 = vmul.f32 %v765, 0.5
        %v834 = vmul.f32 %v767, 0.5
        %v835 = vmul.f32 %v658, 0.5
        %v836 = vmul.f32 %v660, 0.5
        %v837 = vmul.f32 %v771, 0.5
        %v838 = vmul.f32 %v773, 0.5
        %v839 = vmul.f32 %v662, 0.5
        %v840 = vmul.f32 %v664, 0.5
        %v841 = vmul.f32 %v775, 0.5
        %v842 = vmul.f32 %v777, 0.5
        %v843 = vmul.f32 %v588, 0.70710677
        %v844 = vmul.f32 %v590, 0.70710677
        %v845 = vmul.f32 %v701, 0.70710677
        %v846 = vmul.f32 %v703, 0.70710677
        %v847 = vmul.f32 %v592, 0.70710677
        %v848 = vmul.f32 %v594, 0.70710677
        %v849 = vmul.f32 %v705, 0.70710677
        %v850 = vmul.f32 %v707, 0.70710677
        %v851 = vmul.f32 %v598, 0.70710677
        %v852 = vmul.f32 %v600, 0.70710677
        %v853 = vmul.f32 %v711, 0.70710677
        %v854 = vmul.f32 %v713, 0.70710677
        %v855 = vmul.f32 %v602, 0.70710677
        %v856 = vmul.f32 %v604, 0.70710677
        %v857 = vmul.f32 %v715, 0.70710677
        %v858 = vmul.f32 %v717, 0.70710677
        %v859 = vmul.f32 %v608, 0.70710677
        %v860 = vmul.f32 %v610, 0.70710677
        %v861 = vmul.f32 %v721, 0.70710677
        %v862 = vmul.f32 %v723, 0.70710677
        %v863 = vmul.f32 %v612, 0.70710677
        %v864 = vmul.f32 %v614, 0.70710677
        %v865 = vmul.f32 %v725, 0.70710677
        %v866 = vmul.f32 %v727, 0.70710677
        %v867 = vmul.f32 %v618, 0.70710677
        %v868 = vmul.f32 %v620, 0.70710677
        %v869 = vmul.f32 %v731, 0.70710677
        %v870 = vmul.f32 %v733, 0.70710677
        %v871 = vmul.f32 %v622, 0.70710677
        %v872 = vmul.f32 %v624, 0.70710677
        %v873 = vmul.f32 %v735, 0.70710677
        %v874 = vmul.f32 %v737, 0.70710677
        %v875 = vmul.f32 %v628, 0.70710677
        %v876 = vmul.f32 %v630, 0.70710677
        %v877 = vmul.f32 %v741, 0.70710677
        %v878 = vmul.f32 %v743, 0.70710677
        %v879 = vmul.f32 %v632, 0.70710677
        %v880 = vmul.f32 %v634, 0.70710677
        %v881 = vmul.f32 %v745, 0.70710677
        %v882 = vmul.f32 %v747, 0.70710677
        %v883 = vmul.f32 %v638, 0.70710677
        %v884 = vmul.f32 %v640, 0.70710677
        %v885 = vmul.f32 %v751, 0.70710677
        %v886 = vmul.f32 %v753, 0.70710677
        %v887 = vmul.f32 %v642, 0.70710677
        %v888 = vmul.f32 %v644, 0.70710677
        %v889 = vmul.f32 %v755, 0.70710677
        %v890 = vmul.f32 %v757, 0.70710677
        %v891 = vmul.f32 %v648, 0.70710677
        %v892 = vmul.f32 %v650, 0.70710677
        %v893 = vmul.f32 %v761, 0.70710677
        %v894 = vmul.f32 %v763, 0.70710677
        %v895 = vmul.f32 %v652, 0.70710677
        %v896 = vmul.f32 %v654, 0.70710677
        %v897 = vmul.f32 %v765, 0.70710677
        %v898 = vmul.f32 %v767, 0.70710677
        %v899 = vmul.f32 %v658, 0.70710677
        %v900 = vmul.f32 %v660, 0.70710677
        %v901 = vmul.f32 %v771, 0.70710677
        %v902 = vmul.f32 %v773, 0.70710677
        %v903 = vmul.f32 %v662, 0.70710677
        %v904 = vmul.f32 %v664, 0.70710677
        %v905 = vmul.f32 %v775, 0.70710677
        %v906 = vmul.f32 %v777, 0.70710677
        %v907 = verf.f32.pop %v843
        %v908 = verf.f32.pop %v844
        %v909 = verf.f32.pop %v845
        %v910 = verf.f32.pop %v846
        %v911 = verf.f32.pop %v847
        %v912 = verf.f32.pop %v848
        %v913 = verf.f32.pop %v849
        %v914 = verf.f32.pop %v850
        %v915 = verf.f32.pop %v851
        %v916 = verf.f32.pop %v852
        %v917 = verf.f32.pop %v853
        %v918 = verf.f32.pop %v854
        %v919 = verf.f32.pop %v855
        %v920 = verf.f32.pop %v856
        %v921 = verf.f32.pop %v857
        %v922 = verf.f32.pop %v858
        %v923 = verf.f32.pop %v859
        %v924 = verf.f32.pop %v860
        %v925 = verf.f32.pop %v861
        %v926 = verf.f32.pop %v862
        %v927 = verf.f32.pop %v863
        %v928 = verf.f32.pop %v864
        %v929 = verf.f32.pop %v865
        %v930 = verf.f32.pop %v866
        %v931 = verf.f32.pop %v867
        %v932 = verf.f32.pop %v868
        %v933 = verf.f32.pop %v869
        %v934 = verf.f32.pop %v870
        %v935 = verf.f32.pop %v871
        %v936 = verf.f32.pop %v872
        %v937 = verf.f32.pop %v873
        %v938 = verf.f32.pop %v874
        %v939 = verf.f32.pop %v875
        %v940 = verf.f32.pop %v876
        %v941 = verf.f32.pop %v877
        %v942 = verf.f32.pop %v878
        %v943 = verf.f32.pop %v879
        %v944 = verf.f32.pop %v880
        %v945 = verf.f32.pop %v881
        %v946 = verf.f32.pop %v882
        %v947 = verf.f32.pop %v883
        %v948 = verf.f32.pop %v884
        %v949 = verf.f32.pop %v885
        %v950 = verf.f32.pop %v886
        %v951 = verf.f32.pop %v887
        %v952 = verf.f32.pop %v888
        %v953 = verf.f32.pop %v889
        %v954 = verf.f32.pop %v890
        %v955 = verf.f32.pop %v891
        %v956 = verf.f32.pop %v892
        %v957 = verf.f32.pop %v893
        %v958 = verf.f32.pop %v894
        %v959 = verf.f32.pop %v895
        %v960 = verf.f32.pop %v896
        %v961 = verf.f32.pop %v897
        %v962 = verf.f32.pop %v898
        %v963 = verf.f32.pop %v899
        %v964 = verf.f32.pop %v900
        %v965 = verf.f32.pop %v901
        %v966 = verf.f32.pop %v902
        %v967 = verf.f32.pop %v903
        %v968 = verf.f32.pop %v904
        %v969 = verf.f32.pop %v905
        %v970 = verf.f32.pop %v906
        %v971 = vadd.f32 %v907, 1.0
        %v972 = vadd.f32 %v908, 1.0
        %v973 = vadd.f32 %v909, 1.0
        %v974 = vadd.f32 %v910, 1.0
        %v975 = vadd.f32 %v911, 1.0
        %v976 = vadd.f32 %v912, 1.0
        %v977 = vadd.f32 %v913, 1.0
        %v978 = vadd.f32 %v914, 1.0
        %v979 = vadd.f32 %v915, 1.0
        %v980 = vadd.f32 %v916, 1.0
        %v981 = vadd.f32 %v917, 1.0
        %v982 = vadd.f32 %v918, 1.0
        %v983 = vadd.f32 %v919, 1.0
        %v984 = vadd.f32 %v920, 1.0
        %v985 = vadd.f32 %v921, 1.0
        %v986 = vadd.f32 %v922, 1.0
        %v987 = vadd.f32 %v923, 1.0
        %v988 = vadd.f32 %v924, 1.0
        %v989 = vadd.f32 %v925, 1.0
        %v990 = vadd.f32 %v926, 1.0
        %v991 = vadd.f32 %v927, 1.0
        %v992 = vadd.f32 %v928, 1.0
        %v993 = vadd.f32 %v929, 1.0
        %v994 = vadd.f32 %v930, 1.0
        %v995 = vadd.f32 %v931, 1.0
        %v996 = vadd.f32 %v932, 1.0
        %v997 = vadd.f32 %v933, 1.0
        %v998 = vadd.f32 %v934, 1.0
        %v999 = vadd.f32 %v935, 1.0
        %v1000 = vadd.f32 %v936, 1.0
        %v1001 = vadd.f32 %v937, 1.0
        %v1002 = vadd.f32 %v938, 1.0
        %v1003 = vadd.f32 %v939, 1.0
        %v1004 = vadd.f32 %v940, 1.0
        %v1005 = vadd.f32 %v941, 1.0
        %v1006 = vadd.f32 %v942, 1.0
        %v1007 = vadd.f32 %v943, 1.0
        %v1008 = vadd.f32 %v944, 1.0
        %v1009 = vadd.f32 %v945, 1.0
        %v1010 = vadd.f32 %v946, 1.0
        %v1011 = vadd.f32 %v947, 1.0
        %v1012 = vadd.f32 %v948, 1.0
        %v1013 = vadd.f32 %v949, 1.0
        %v1014 = vadd.f32 %v950, 1.0
        %v1015 = vadd.f32 %v951, 1.0
        %v1016 = vadd.f32 %v952, 1.0
        %v1017 = vadd.f32 %v953, 1.0
        %v1018 = vadd.f32 %v954, 1.0
        %v1019 = vadd.f32 %v955, 1.0
        %v1020 = vadd.f32 %v956, 1.0
        %v1021 = vadd.f32 %v957, 1.0
        %v1022 = vadd.f32 %v958, 1.0
        %v1023 = vadd.f32 %v959, 1.0
        %v1024 = vadd.f32 %v960, 1.0
        %v1025 = vadd.f32 %v961, 1.0
        %v1026 = vadd.f32 %v962, 1.0
        %v1027 = vadd.f32 %v963, 1.0
        %v1028 = vadd.f32 %v964, 1.0
        %v1029 = vadd.f32 %v965, 1.0
        %v1030 = vadd.f32 %v966, 1.0
        %v1031 = vadd.f32 %v967, 1.0
        %v1032 = vadd.f32 %v968, 1.0
        %v1033 = vadd.f32 %v969, 1.0
        %v1034 = vadd.f32 %v970, 1.0
        %v1035 = vmul.f32 %v779, %v971
        %v1036 = vmul.f32 %v780, %v972
        %v1037 = vmul.f32 %v781, %v973
        %v1038 = vmul.f32 %v782, %v974
        %v1039 = vmul.f32 %v783, %v975
        %v1040 = vmul.f32 %v784, %v976
        %v1041 = vmul.f32 %v785, %v977
        %v1042 = vmul.f32 %v786, %v978
        %v1043 = vmul.f32 %v787, %v979
        %v1044 = vmul.f32 %v788, %v980
        %v1045 = vmul.f32 %v789, %v981
        %v1046 = vmul.f32 %v790, %v982
        %v1047 = vmul.f32 %v791, %v983
        %v1048 = vmul.f32 %v792, %v984
        %v1049 = vmul.f32 %v793, %v985
        %v1050 = vmul.f32 %v794, %v986
        %v1051 = vmul.f32 %v795, %v987
        %v1052 = vmul.f32 %v796, %v988
        %v1053 = vmul.f32 %v797, %v989
        %v1054 = vmul.f32 %v798, %v990
        %v1055 = vmul.f32 %v799, %v991
        %v1056 = vmul.f32 %v800, %v992
        %v1057 = vmul.f32 %v801, %v993
        %v1058 = vmul.f32 %v802, %v994
        %v1059 = vmul.f32 %v803, %v995
        %v1060 = vmul.f32 %v804, %v996
        %v1061 = vmul.f32 %v805, %v997
        %v1062 = vmul.f32 %v806, %v998
        %v1063 = vmul.f32 %v807, %v999
        %v1064 = vmul.f32 %v808, %v1000
        %v1065 = vmul.f32 %v809, %v1001
        %v1066 = vmul.f32 %v810, %v1002
        %v1067 = vmul.f32 %v811, %v1003
        %v1068 = vmul.f32 %v812, %v1004
        %v1069 = vmul.f32 %v813, %v1005
        %v1070 = vmul.f32 %v814, %v1006
        %v1071 = vmul.f32 %v815, %v1007
        %v1072 = vmul.f32 %v816, %v1008
        %v1073 = vmul.f32 %v817, %v1009
        %v1074 = vmul.f32 %v818, %v1010
        %v1075 = vmul.f32 %v819, %v1011
        %v1076 = vmul.f32 %v820, %v1012
        %v1077 = vmul.f32 %v821, %v1013
        %v1078 = vmul.f32 %v822, %v1014
        %v1079 = vmul.f32 %v823, %v1015
        %v1080 = vmul.f32 %v824, %v1016
        %v1081 = vmul.f32 %v825, %v1017
        %v1082 = vmul.f32 %v826, %v1018
        %v1083 = vmul.f32 %v827, %v1019
        %v1084 = vmul.f32 %v828, %v1020
        %v1085 = vmul.f32 %v829, %v1021
        %v1086 = vmul.f32 %v830, %v1022
        %v1087 = vmul.f32 %v831, %v1023
        %v1088 = vmul.f32 %v832, %v1024
        %v1089 = vmul.f32 %v833, %v1025
        %v1090 = vmul.f32 %v834, %v1026
        %v1091 = vmul.f32 %v835, %v1027
        %v1092 = vmul.f32 %v836, %v1028
        %v1093 = vmul.f32 %v837, %v1029
        %v1094 = vmul.f32 %v838, %v1030
        %v1095 = vmul.f32 %v839, %v1031
        %v1096 = vmul.f32 %v840, %v1032
        %v1097 = vmul.f32 %v841, %v1033
        %v1098 = vmul.f32 %v842, %v1034
        %v1099 = vpack.c.bf16 %v1039, %v1035
        %v1100 = vpack.c.bf16 %v1040, %v1036
        %v1101 = vpack.c.bf16 %v1041, %v1037
        %v1102 = vpack.c.bf16 %v1042, %v1038
        %v1103 = vpack.c.bf16 %v1047, %v1043
        %v1104 = vpack.c.bf16 %v1048, %v1044
        %v1105 = vpack.c.bf16 %v1049, %v1045
        %v1106 = vpack.c.bf16 %v1050, %v1046
        %v1107 = vpack.c.bf16 %v1055, %v1051
        %v1108 = vpack.c.bf16 %v1056, %v1052
        %v1109 = vpack.c.bf16 %v1057, %v1053
        %v1110 = vpack.c.bf16 %v1058, %v1054
        %v1111 = vpack.c.bf16 %v1063, %v1059
        %v1112 = vpack.c.bf16 %v1064, %v1060
        %v1113 = vpack.c.bf16 %v1065, %v1061
        %v1114 = vpack.c.bf16 %v1066, %v1062
        %v1115 = vpack.c.bf16 %v1071, %v1067
        %v1116 = vpack.c.bf16 %v1072, %v1068
        %v1117 = vpack.c.bf16 %v1073, %v1069
        %v1118 = vpack.c.bf16 %v1074, %v1070
        %v1119 = vpack.c.bf16 %v1079, %v1075
        %v1120 = vpack.c.bf16 %v1080, %v1076
        %v1121 = vpack.c.bf16 %v1081, %v1077
        %v1122 = vpack.c.bf16 %v1082, %v1078
        %v1123 = vpack.c.bf16 %v1087, %v1083
        %v1124 = vpack.c.bf16 %v1088, %v1084
        %v1125 = vpack.c.bf16 %v1089, %v1085
        %v1126 = vpack.c.bf16 %v1090, %v1086
        %v1127 = vpack.c.bf16 %v1095, %v1091
        %v1128 = vpack.c.bf16 %v1096, %v1092
        %v1129 = vpack.c.bf16 %v1097, %v1093
        %v1130 = vpack.c.bf16 %v1098, %v1094
        %v1131 = vld [vmem:[#allocation7] sm:$0xf]
        %v1132 = vld [vmem:[#allocation7 + $0x4] sm:$0xf]
        %v1133 = vld [vmem:[#allocation7 + $0x8] sm:$0xf]
        %v1134 = vld [vmem:[#allocation7 + $0xc] sm:$0xf]
        %v1135 = vld [vmem:[#allocation7 + $0x10] sm:$0xf]
        %v1136 = vld [vmem:[#allocation7 + $0x14] sm:$0xf]
        %v1137 = vld [vmem:[#allocation7 + $0x18] sm:$0xf]
        %v1138 = vld [vmem:[#allocation7 + $0x1c] sm:$0xf]
        %v1139 = vld [vmem:[#allocation7 + $0x20] sm:$0xf]
        %v1140 = vld [vmem:[#allocation7 + $0x24] sm:$0xf]
        %v1141 = vld [vmem:[#allocation7 + $0x28] sm:$0xf]
        %v1142 = vld [vmem:[#allocation7 + $0x2c] sm:$0xf]
        %v1143 = vld [vmem:[#allocation7 + $0x30] sm:$0xf]
        %v1144 = vld [vmem:[#allocation7 + $0x34] sm:$0xf]
        %v1145 = vld [vmem:[#allocation7 + $0x38] sm:$0xf]
        %v1146 = vld [vmem:[#allocation7 + $0x3c] sm:$0xf]
        %v1147 = vld [vmem:[#allocation7 + $0x40] sm:$0xf]
        %v1148 = vld [vmem:[#allocation7 + $0x44] sm:$0xf]
        %v1149 = vld [vmem:[#allocation7 + $0x48] sm:$0xf]
        %v1150 = vld [vmem:[#allocation7 + $0x4c] sm:$0xf]
        %v1151 = vld [vmem:[#allocation7 + $0x50] sm:$0xf]
        %v1152 = vld [vmem:[#allocation7 + $0x54] sm:$0xf]
        %v1153 = vld [vmem:[#allocation7 + $0x58] sm:$0xf]
        %v1154 = vld [vmem:[#allocation7 + $0x5c] sm:$0xf]
        %v1155 = vld [vmem:[#allocation7 + $0x60] sm:$0xf]
        %v1156 = vld [vmem:[#allocation7 + $0x64] sm:$0xf]
        %v1157 = vld [vmem:[#allocation7 + $0x68] sm:$0xf]
        %v1158 = vld [vmem:[#allocation7 + $0x6c] sm:$0xf]
        %v1159 = vld [vmem:[#allocation7 + $0x70] sm:$0xf]
        %v1160 = vld [vmem:[#allocation7 + $0x74] sm:$0xf]
        %v1161 = vld [vmem:[#allocation7 + $0x78] sm:$0xf]
        %v1162 = vld [vmem:[#allocation7 + $0x7c] sm:$0xf]
        %v1163 = vld [vmem:[#allocation7 + $0x80] sm:$0xf]
        %v1164 = vld [vmem:[#allocation7 + $0x84] sm:$0xf]
        %v1165 = vld [vmem:[#allocation7 + $0x88] sm:$0xf]
        %v1166 = vld [vmem:[#allocation7 + $0x8c] sm:$0xf]
        %v1167 = vld [vmem:[#allocation7 + $0x90] sm:$0xf]
        %v1168 = vld [vmem:[#allocation7 + $0x94] sm:$0xf]
        %v1169 = vld [vmem:[#allocation7 + $0x98] sm:$0xf]
        %v1170 = vld [vmem:[#allocation7 + $0x9c] sm:$0xf]
        %v1171 = vld [vmem:[#allocation7 + $0xa0] sm:$0xf]
        %v1172 = vld [vmem:[#allocation7 + $0xa4] sm:$0xf]
        %v1173 = vld [vmem:[#allocation7 + $0xa8] sm:$0xf]
        %v1174 = vld [vmem:[#allocation7 + $0xac] sm:$0xf]
        %v1175 = vld [vmem:[#allocation7 + $0xb0] sm:$0xf]
        %v1176 = vld [vmem:[#allocation7 + $0xb4] sm:$0xf]
        %v1177 = vld [vmem:[#allocation7 + $0xb8] sm:$0xf]
        %v1178 = vld [vmem:[#allocation7 + $0xbc] sm:$0xf]
        %v1179 = vld [vmem:[#allocation7 + $0xc0] sm:$0xf]
        %v1180 = vld [vmem:[#allocation7 + $0xc4] sm:$0xf]
        %v1181 = vld [vmem:[#allocation7 + $0xc8] sm:$0xf]
        %v1182 = vld [vmem:[#allocation7 + $0xcc] sm:$0xf]
        %v1183 = vld [vmem:[#allocation7 + $0xd0] sm:$0xf]
        %v1184 = vld [vmem:[#allocation7 + $0xd4] sm:$0xf]
        %v1185 = vld [vmem:[#allocation7 + $0xd8] sm:$0xf]
        %v1186 = vld [vmem:[#allocation7 + $0xdc] sm:$0xf]
        %v1187 = vld [vmem:[#allocation7 + $0xe0] sm:$0xf]
        %v1188 = vld [vmem:[#allocation7 + $0xe4] sm:$0xf]
        %v1189 = vld [vmem:[#allocation7 + $0xe8] sm:$0xf]
        %v1190 = vld [vmem:[#allocation7 + $0xec] sm:$0xf]
        %v1191 = vld [vmem:[#allocation7 + $0xf0] sm:$0xf]
        %v1192 = vld [vmem:[#allocation7 + $0xf4] sm:$0xf]
        %v1193 = vld [vmem:[#allocation7 + $0xf8] sm:$0xf]
        %v1194 = vld [vmem:[#allocation7 + $0xfc] sm:$0xf]
        %v1195 = vld [vmem:[%s4] sm:$0x1]
        %v1197 = vlaneseq
        %v1198 = vshrl.u32 %v1197, 7
        %v1199 = vsub.s32 0, %v1198
        %v1200 = vrot.slane %v1195, %v1199
        %v1266 = vunpack.c.l.b16 %v1131
        %v1267 = vunpack.c.l.b16 %v1132
        %v1268 = vunpack.c.l.b16 %v1133
        %v1269 = vunpack.c.l.b16 %v1134
        %v1270 = vunpack.c.l.b16 %v1135
        %v1271 = vunpack.c.l.b16 %v1136
        %v1272 = vunpack.c.l.b16 %v1137
        %v1273 = vunpack.c.l.b16 %v1138
        %v1274 = vunpack.c.l.b16 %v1139
        %v1275 = vunpack.c.l.b16 %v1140
        %v1276 = vunpack.c.l.b16 %v1141
        %v1277 = vunpack.c.l.b16 %v1142
        %v1278 = vunpack.c.l.b16 %v1143
        %v1279 = vunpack.c.l.b16 %v1144
        %v1280 = vunpack.c.l.b16 %v1145
        %v1281 = vunpack.c.l.b16 %v1146
        %v1282 = vunpack.c.l.b16 %v1147
        %v1283 = vunpack.c.l.b16 %v1148
        %v1284 = vunpack.c.l.b16 %v1149
        %v1285 = vunpack.c.l.b16 %v1150
        %v1286 = vunpack.c.l.b16 %v1151
        %v1287 = vunpack.c.l.b16 %v1152
        %v1288 = vunpack.c.l.b16 %v1153
        %v1289 = vunpack.c.l.b16 %v1154
        %v1290 = vunpack.c.l.b16 %v1155
        %v1291 = vunpack.c.l.b16 %v1156
        %v1292 = vunpack.c.l.b16 %v1157
        %v1293 = vunpack.c.l.b16 %v1158
        %v1294 = vunpack.c.l.b16 %v1159
        %v1295 = vunpack.c.l.b16 %v1160
        %v1296 = vunpack.c.l.b16 %v1161
        %v1297 = vunpack.c.l.b16 %v1162
        %v1298 = vunpack.c.l.b16 %v1163
        %v1299 = vunpack.c.l.b16 %v1164
        %v1300 = vunpack.c.l.b16 %v1165
        %v1301 = vunpack.c.l.b16 %v1166
        %v1302 = vunpack.c.l.b16 %v1167
        %v1303 = vunpack.c.l.b16 %v1168
        %v1304 = vunpack.c.l.b16 %v1169
        %v1305 = vunpack.c.l.b16 %v1170
        %v1306 = vunpack.c.l.b16 %v1171
        %v1307 = vunpack.c.l.b16 %v1172
        %v1308 = vunpack.c.l.b16 %v1173
        %v1309 = vunpack.c.l.b16 %v1174
        %v1310 = vunpack.c.l.b16 %v1175
        %v1311 = vunpack.c.l.b16 %v1176
        %v1312 = vunpack.c.l.b16 %v1177
        %v1313 = vunpack.c.l.b16 %v1178
        %v1314 = vunpack.c.l.b16 %v1179
        %v1315 = vunpack.c.l.b16 %v1180
        %v1316 = vunpack.c.l.b16 %v1181
        %v1317 = vunpack.c.l.b16 %v1182
        %v1318 = vunpack.c.l.b16 %v1183
        %v1319 = vunpack.c.l.b16 %v1184
        %v1320 = vunpack.c.l.b16 %v1185
        %v1321 = vunpack.c.l.b16 %v1186
        %v1322 = vunpack.c.l.b16 %v1187
        %v1323 = vunpack.c.l.b16 %v1188
        %v1324 = vunpack.c.l.b16 %v1189
        %v1325 = vunpack.c.l.b16 %v1190
        %v1326 = vunpack.c.l.b16 %v1191
        %v1327 = vunpack.c.l.b16 %v1192
        %v1328 = vunpack.c.l.b16 %v1193
        %v1329 = vunpack.c.l.b16 %v1194
        %v1330 = vpack.c.b16 %v1267, %v1266
        %v1331 = vpack.c.b16 %v1269, %v1268
        %v1332 = vpack.c.b16 %v1271, %v1270
        %v1333 = vpack.c.b16 %v1273, %v1272
        %v1334 = vpack.c.b16 %v1275, %v1274
        %v1335 = vpack.c.b16 %v1277, %v1276
        %v1336 = vpack.c.b16 %v1279, %v1278
        %v1337 = vpack.c.b16 %v1281, %v1280
        %v1338 = vpack.c.b16 %v1283, %v1282
        %v1339 = vpack.c.b16 %v1285, %v1284
        %v1340 = vpack.c.b16 %v1287, %v1286
        %v1341 = vpack.c.b16 %v1289, %v1288
        %v1342 = vpack.c.b16 %v1291, %v1290
        %v1343 = vpack.c.b16 %v1293, %v1292
        %v1344 = vpack.c.b16 %v1295, %v1294
        %v1345 = vpack.c.b16 %v1297, %v1296
        %v1346 = vpack.c.b16 %v1299, %v1298
        %v1347 = vpack.c.b16 %v1301, %v1300
        %v1348 = vpack.c.b16 %v1303, %v1302
        %v1349 = vpack.c.b16 %v1305, %v1304
        %v1350 = vpack.c.b16 %v1307, %v1306
        %v1351 = vpack.c.b16 %v1309, %v1308
        %v1352 = vpack.c.b16 %v1311, %v1310
        %v1353 = vpack.c.b16 %v1313, %v1312
        %v1354 = vpack.c.b16 %v1315, %v1314
        %v1355 = vpack.c.b16 %v1317, %v1316
        %v1356 = vpack.c.b16 %v1319, %v1318
        %v1357 = vpack.c.b16 %v1321, %v1320
        %v1358 = vpack.c.b16 %v1323, %v1322
        %v1359 = vpack.c.b16 %v1325, %v1324
        %v1360 = vpack.c.b16 %v1327, %v1326
        %v1361 = vpack.c.b16 %v1329, %v1328
        %1394 = vmatprep.subr.bf16.mxu0 0
        %1395 = vmatpush1.bf16.msra.mxu0 %v1330
        %1396 = vmatprep.subr.bf16.mxu0 0
        %1397 = vmatpush1.bf16.msra.mxu0 %v1331
        %1398 = vmatprep.subr.bf16.mxu0 0
        %1399 = vmatpush1.bf16.msra.mxu0 %v1332
        %1400 = vmatprep.subr.bf16.mxu0 0
        %1401 = vmatpush1.bf16.msra.mxu0 %v1333
        %1402 = vmatprep.subr.bf16.mxu0 0
        %1403 = vmatpush1.bf16.msra.mxu0 %v1334
        %1404 = vmatprep.subr.bf16.mxu0 0
        %1405 = vmatpush1.bf16.msra.mxu0 %v1335
        %1406 = vmatprep.subr.bf16.mxu0 0
        %1407 = vmatpush1.bf16.msra.mxu0 %v1336
        %1408 = vmatprep.subr.bf16.mxu0 0
        %1409 = vmatpush1.bf16.msra.mxu0 %v1337
        %1410 = vmatprep.subr.bf16.mxu0 0
        %1411 = vmatpush1.bf16.msra.mxu0 %v1338
        %1412 = vmatprep.subr.bf16.mxu0 0
        %1413 = vmatpush1.bf16.msra.mxu0 %v1339
        %1414 = vmatprep.subr.bf16.mxu0 0
        %1415 = vmatpush1.bf16.msra.mxu0 %v1340
        %1416 = vmatprep.subr.bf16.mxu0 0
        %1417 = vmatpush1.bf16.msra.mxu0 %v1341
        %1418 = vmatprep.subr.bf16.mxu0 0
        %1419 = vmatpush1.bf16.msra.mxu0 %v1342
        %1420 = vmatprep.subr.bf16.mxu0 0
        %1421 = vmatpush1.bf16.msra.mxu0 %v1343
        %1422 = vmatprep.subr.bf16.mxu0 0
        %1423 = vmatpush1.bf16.msra.mxu0 %v1344
        %1424 = vmatprep.subr.bf16.mxu0 0
        %1425 = vmatpush1.bf16.msra.mxu0 %v1345
        %1426 = vmatprep.mubr.bf16.mxu0 %v1100
        %1427 = vmatmul.mubr.bf16.gmra.mrb[0].mxu0 %v1099
        %v1428 = vpop.f32.mrb[0].mxu0
        %v1429 = vadd.f32 %v1200, %v1428
        %v1430 = vpop.f32.mrb[0].mxu0
        %v1431 = vpop.f32.mrb[0].mxu0
        %v1432 = vadd.f32 %v1200, %v1431
        %v1433 = vpop.f32.mrb[0].mxu0
        %1434 = vmatprep.mubr.bf16.mxu0 %v1104
        %1435 = vmatmul.mubr.bf16.gmra.mrb[0].mxu0 %v1103
        %v1436 = vpop.f32.mrb[0].mxu0
        %v1437 = vadd.f32 %v1200, %v1436
        %v1438 = vpop.f32.mrb[0].mxu0
        %v1439 = vpop.f32.mrb[0].mxu0
        %v1440 = vadd.f32 %v1200, %v1439
        %v1441 = vpop.f32.mrb[0].mxu0
        %1442 = vmatprep.mubr.bf16.mxu0 %v1108
        %1443 = vmatmul.mubr.bf16.gmra.mrb[0].mxu0 %v1107
        %v1444 = vpop.f32.mrb[0].mxu0
        %v1445 = vadd.f32 %v1200, %v1444
        %v1446 = vpop.f32.mrb[0].mxu0
        %v1447 = vpop.f32.mrb[0].mxu0
        %v1448 = vadd.f32 %v1200, %v1447
        %v1449 = vpop.f32.mrb[0].mxu0
        %1450 = vmatprep.mubr.bf16.mxu0 %v1112
        %1451 = vmatmul.mubr.bf16.gmra.mrb[0].mxu0 %v1111
        %v1452 = vpop.f32.mrb[0].mxu0
        %v1453 = vadd.f32 %v1200, %v1452
        %v1454 = vpop.f32.mrb[0].mxu0
        %v1455 = vpop.f32.mrb[0].mxu0
        %v1456 = vadd.f32 %v1200, %v1455
        %v1457 = vpop.f32.mrb[0].mxu0
        %1458 = vmatprep.mubr.bf16.mxu0 %v1116
        %1459 = vmatmul.mubr.bf16.gmra.mrb[0].mxu0 %v1115
        %v1460 = vpop.f32.mrb[0].mxu0
        %v1461 = vadd.f32 %v1200, %v1460
        %v1462 = vpop.f32.mrb[0].mxu0
        %v1463 = vpop.f32.mrb[0].mxu0
        %v1464 = vadd.f32 %v1200, %v1463
        %v1465 = vpop.f32.mrb[0].mxu0
        %1466 = vmatprep.mubr.bf16.mxu0 %v1120
        %1467 = vmatmul.mubr.bf16.gmra.mrb[0].mxu0 %v1119
        %v1468 = vpop.f32.mrb[0].mxu0
        %v1469 = vadd.f32 %v1200, %v1468
        %v1470 = vpop.f32.mrb[0].mxu0
        %v1471 = vpop.f32.mrb[0].mxu0
        %v1472 = vadd.f32 %v1200, %v1471
        %v1473 = vpop.f32.mrb[0].mxu0
        %1474 = vmatprep.mubr.bf16.mxu0 %v1124
        %1475 = vmatmul.mubr.bf16.gmra.mrb[0].mxu0 %v1123
        %v1476 = vpop.f32.mrb[0].mxu0
        %v1477 = vadd.f32 %v1200, %v1476
        %v1478 = vpop.f32.mrb[0].mxu0
        %v1479 = vpop.f32.mrb[0].mxu0
        %v1480 = vadd.f32 %v1200, %v1479
        %v1481 = vpop.f32.mrb[0].mxu0
        %1482 = vmatprep.mubr.bf16.mxu0 %v1128
        %1483 = vmatmul.mubr.bf16.gmra.mrb[0].mxu0 %v1127
        %v1484 = vpop.f32.mrb[0].mxu0
        %v1485 = vadd.f32 %v1200, %v1484
        %v1486 = vpop.f32.mrb[0].mxu0
        %v1487 = vpop.f32.mrb[0].mxu0
        %v1488 = vadd.f32 %v1200, %v1487
        %v1489 = vpop.f32.mrb[0].mxu0
        %1490 = vdwg.mxu0
        %1491 = vmatprep.subr.bf16.mxu0 0
        %1492 = vmatpush1.bf16.msra.mxu0 %v1346
        %1493 = vmatprep.subr.bf16.mxu0 0
        %1494 = vmatpush1.bf16.msra.mxu0 %v1347
        %1495 = vmatprep.subr.bf16.mxu0 0
        %1496 = vmatpush1.bf16.msra.mxu0 %v1348
        %1497 = vmatprep.subr.bf16.mxu0 0
        %1498 = vmatpush1.bf16.msra.mxu0 %v1349
        %1499 = vmatprep.subr.bf16.mxu0 0
        %1500 = vmatpush1.bf16.msra.mxu0 %v1350
        %1501 = vmatprep.subr.bf16.mxu0 0
        %1502 = vmatpush1.bf16.msra.mxu0 %v1351
        %1503 = vmatprep.subr.bf16.mxu0 0
        %1504 = vmatpush1.bf16.msra.mxu0 %v1352
        %1505 = vmatprep.subr.bf16.mxu0 0
        %1506 = vmatpush1.bf16.msra.mxu0 %v1353
        %1507 = vmatprep.subr.bf16.mxu0 0
        %1508 = vmatpush1.bf16.msra.mxu0 %v1354
        %1509 = vmatprep.subr.bf16.mxu0 0
        %1510 = vmatpush1.bf16.msra.mxu0 %v1355
        %1511 = vmatprep.subr.bf16.mxu0 0
        %1512 = vmatpush1.bf16.msra.mxu0 %v1356
        %1513 = vmatprep.subr.bf16.mxu0 0
        %1514 = vmatpush1.bf16.msra.mxu0 %v1357
        %1515 = vmatprep.subr.bf16.mxu0 0
        %1516 = vmatpush1.bf16.msra.mxu0 %v1358
        %1517 = vmatprep.subr.bf16.mxu0 0
        %1518 = vmatpush1.bf16.msra.mxu0 %v1359
        %1519 = vmatprep.subr.bf16.mxu0 0
        %1520 = vmatpush1.bf16.msra.mxu0 %v1360
        %1521 = vmatprep.subr.bf16.mxu0 0
        %1522 = vmatpush1.bf16.msra.mxu0 %v1361
        %1523 = vmatprep.mubr.bf16.mxu0 %v1102
        %1524 = vmatmul.mubr.bf16.gmra.mrb[0].mxu0 %v1101
        %v1525 = vpop.f32.mrb[0].mxu0
        %v1526 = vadd.f32 %v1429, %v1525
        %v1527 = vpop.f32.mrb[0].mxu0
        %v1528 = vpop.f32.mrb[0].mxu0
        %v1529 = vadd.f32 %v1432, %v1528
        %v1530 = vpop.f32.mrb[0].mxu0
        %1531 = vmatprep.mubr.bf16.mxu0 %v1106
        %1532 = vmatmul.mubr.bf16.gmra.mrb[0].mxu0 %v1105
        %v1533 = vpop.f32.mrb[0].mxu0
        %v1534 = vadd.f32 %v1437, %v1533
        %v1535 = vpop.f32.mrb[0].mxu0
        %v1536 = vpop.f32.mrb[0].mxu0
        %v1537 = vadd.f32 %v1440, %v1536
        %v1538 = vpop.f32.mrb[0].mxu0
        %1539 = vmatprep.mubr.bf16.mxu0 %v1110
        %1540 = vmatmul.mubr.bf16.gmra.mrb[0].mxu0 %v1109
        %v1541 = vpop.f32.mrb[0].mxu0
        %v1542 = vadd.f32 %v1445, %v1541
        %v1543 = vpop.f32.mrb[0].mxu0
        %v1544 = vpop.f32.mrb[0].mxu0
        %v1545 = vadd.f32 %v1448, %v1544
        %v1546 = vpop.f32.mrb[0].mxu0
        %1547 = vmatprep.mubr.bf16.mxu0 %v1114
        %1548 = vmatmul.mubr.bf16.gmra.mrb[0].mxu0 %v1113
        %v1549 = vpop.f32.mrb[0].mxu0
        %v1550 = vadd.f32 %v1453, %v1549
        %v1551 = vpop.f32.mrb[0].mxu0
        %v1552 = vpop.f32.mrb[0].mxu0
        %v1553 = vadd.f32 %v1456, %v1552
        %v1554 = vpop.f32.mrb[0].mxu0
        %1555 = vmatprep.mubr.bf16.mxu0 %v1118
        %1556 = vmatmul.mubr.bf16.gmra.mrb[0].mxu0 %v1117
        %v1557 = vpop.f32.mrb[0].mxu0
        %v1558 = vadd.f32 %v1461, %v1557
        %v1559 = vpop.f32.mrb[0].mxu0
        %v1560 = vpop.f32.mrb[0].mxu0
        %v1561 = vadd.f32 %v1464, %v1560
        %v1562 = vpop.f32.mrb[0].mxu0
        %1563 = vmatprep.mubr.bf16.mxu0 %v1122
        %1564 = vmatmul.mubr.bf16.gmra.mrb[0].mxu0 %v1121
        %v1565 = vpop.f32.mrb[0].mxu0
        %v1566 = vadd.f32 %v1469, %v1565
        %v1567 = vpop.f32.mrb[0].mxu0
        %v1568 = vpop.f32.mrb[0].mxu0
        %v1569 = vadd.f32 %v1472, %v1568
        %v1570 = vpop.f32.mrb[0].mxu0
        %1571 = vmatprep.mubr.bf16.mxu0 %v1126
        %1572 = vmatmul.mubr.bf16.gmra.mrb[0].mxu0 %v1125
        %v1573 = vpop.f32.mrb[0].mxu0
        %v1574 = vadd.f32 %v1477, %v1573
        %v1575 = vpop.f32.mrb[0].mxu0
        %v1576 = vpop.f32.mrb[0].mxu0
        %v1577 = vadd.f32 %v1480, %v1576
        %v1578 = vpop.f32.mrb[0].mxu0
        %1579 = vmatprep.mubr.bf16.mxu0 %v1130
        %1580 = vmatmul.mubr.bf16.gmra.mrb[0].mxu0 %v1129
        %v1581 = vpop.f32.mrb[0].mxu0
        %v1582 = vadd.f32 %v1485, %v1581
        %v1583 = vpop.f32.mrb[0].mxu0
        %v1584 = vpop.f32.mrb[0].mxu0
        %v1585 = vadd.f32 %v1488, %v1584
        %v1586 = vpop.f32.mrb[0].mxu0
        %1587 = vdwg.mxu0
        %1588 = vst [vmem:[%s271] sm:$0xff] %v1526
        %1589 = vst [vmem:[%s271 + $0x8] sm:$0xff] %v1529
        %1590 = vst [vmem:[%s271 + $0x10] sm:$0xff] %v1534
        %1591 = vst [vmem:[%s271 + $0x18] sm:$0xff] %v1537
        %1592 = vst [vmem:[%s271 + $0x20] sm:$0xff] %v1542
        %1593 = vst [vmem:[%s271 + $0x28] sm:$0xff] %v1545
        %1594 = vst [vmem:[%s271 + $0x30] sm:$0xff] %v1550
        %1595 = vst [vmem:[%s271 + $0x38] sm:$0xff] %v1553
        %1596 = vst [vmem:[%s271 + $0x40] sm:$0xff] %v1558
        %1597 = vst [vmem:[%s271 + $0x48] sm:$0xff] %v1561
        %1598 = vst [vmem:[%s271 + $0x50] sm:$0xff] %v1566
        %1599 = vst [vmem:[%s271 + $0x58] sm:$0xff] %v1569
        %1600 = vst [vmem:[%s271 + $0x60] sm:$0xff] %v1574
        %1601 = vst [vmem:[%s271 + $0x68] sm:$0xff] %v1577
        %1602 = vst [vmem:[%s271 + $0x70] sm:$0xff] %v1582
        %1603 = vst [vmem:[%s271 + $0x78] sm:$0xff] %v1585
        %s1604 = sand.u32 %s141, 1
        %s1605 = scalar_lea.sflag [#allocation4], %s1604
        %s1606 = sand.u32 %s141, 1
        %s1607 = smul.addr %s1606, 128
        %s1608 = scalar_lea.vmem [#allocation8], %s1607
        // Predicated region
        $region53: #{tpu_custom_call.1} parent=39 // pred_check
          %p1609 = pneg %p151
        $region54: #{tpu_custom_call.1} parent=39 // pred_check_branch
          %1611 = sbr.rel (%p1609) target = $region56
        $region55: #{tpu_custom_call.1} parent=39 // pred_region
          %s1612 = smul.u32 16, %s23
          %s1614 = ssub.s32 2048, 2048
          %1615 = vsyncadd %s1605, %s1614
          %s1616 = smul.addr %s1612, 128
          %s1617 = scalar_lea.hbm %s5, %s1616
          %s1618 = sshll.u32 %s1608, 4
          %s1619 = int_to_ptr.vmem [resolvable:$true] %s1618
          %1624 = dma.vmem_to_hbm [thread:$0]  %s1619, 2048, %s1617, %s1605, 128, 128, 8
        $region56: #{tpu_custom_call.1} parent=39 // pred_fallthru
          _
      $region40: #{tpu_custom_call.1} parent=5 // pred_fallthru
        _
      %p1625 = scmp.le.s32.totalorder 2, %s18
      // Predicated region
      $region57: #{tpu_custom_call.1} parent=5 // pred_check
        %p1626 = pneg %p1625
      $region58: #{tpu_custom_call.1} parent=5 // pred_check_branch
        %1628 = sbr.rel (%p1626) target = $region60
      $region59: #{tpu_custom_call.1} parent=5 // pred_region
        %s1629 = ssub.s32 %s18, 2
        // Predicated region
        $region61: #{tpu_custom_call.1} parent=59 // pred_check
          %p1630 = pneg %p157
        $region62: #{tpu_custom_call.1} parent=59 // pred_check_branch
          %1632 = sbr.rel (%p1630) target = $region64
        $region63: #{tpu_custom_call.1} parent=59 // pred_region
          %s1633 = sand.u32 %s142, 1
          %s1634 = scalar_lea.sflag [#allocation4], %s1633
          %s1635 = sand.u32 %s142, 1
          %s1636 = smul.addr %s1635, 128
          %s1637 = scalar_lea.vmem [#allocation8], %s1636
          %1638 = dma.done %s1634, 2048
        $region64: #{tpu_custom_call.1} parent=59 // pred_fallthru
          _
      $region60: #{tpu_custom_call.1} parent=5 // pred_fallthru
        _
    $region6: #{tpu_custom_call.1} parent=1 // loop_footer
      %s22 = sadd.s32 1, %s18
    $region7: #{tpu_custom_call.1} parent=1 // loop_footer_branch
      %17 = sbr.rel target = $region3
    $region8: #{tpu_custom_call.1} parent=1 // loop_exit
      _
    %1639 = vsyncpa [#allocation3], 1
    %s1640 = scalar_lea.sflag [#allocation3], 1
    %1641 = vsyncpa %s1640, 1
    %1642 = vsyncpa [#allocation6], 1
    %1643 = vsyncpa [#allocation4], 1
    %s1644 = scalar_lea.sflag [#allocation4], 1
    %1645 = vsyncpa %s1644, 1

</llo_original>
